<compile_context>
chip_gen: v7x
topology: tpu7x:2x2x1
jax: 0.10.0
libtpu: 0.0.40
codegen_flags: <defaults>
</compile_context>

<pallas_src>
import math
import functools

import jax
import jax.numpy as jnp
from jax import lax
from jax.experimental import pallas as pl
from jax.experimental.pallas import tpu as pltpu


# ----------------------------------------------------------------------------
# Phase 1: fused QKV projection + RoPE + L2 norm + sqk scaling (per T chunk)
# ----------------------------------------------------------------------------
def qkv_precompute_kernel(x_ref, w_qkv_ref, cos_ref, sins_ref, sqk_q_ref,
                          sqk_k_ref, q_out, k_out, v_out,
                          *, n_head, head_dim, norm_eps):
    H, hd = n_head, head_dim
    half = hd // 2
    D = x_ref.shape[2]

    def l2norm(v):
        nrm = jnp.sqrt(jnp.sum(v * v, axis=-1, keepdims=True))
        return v * pl.reciprocal(jnp.maximum(nrm, norm_eps), approx=True)

    xb = x_ref[0].astype(jnp.bfloat16)                           # (TC, D)
    qkv = jnp.dot(xb, w_qkv_ref[...],                            # one fused matmul
                  preferred_element_type=jnp.float32)            # (TC, 3D) f32
    cos = cos_ref[...]                                           # (TC, hd)
    sins = sins_ref[...]                                         # sign-folded sin

    def rope(t):                                                 # rotate_half via XLU roll
        return t * cos + pltpu.roll(t, half, axis=1) * sins

    # Static per-head loop: elementwise/XLU only; stores straight to head-major
    # bf16 output blocks (no concat, no big f32 intermediates beyond the chunk).
    for h in range(H):
        c = h * hd
        q_out[0, h] = (sqk_q_ref[:, c:c + hd] *                  # sqrt(hd)*sqk folded
                       l2norm(rope(qkv[:, c:c + hd]))).astype(jnp.bfloat16)
        k_out[0, h] = (sqk_k_ref[:, c:c + hd] *
                       l2norm(rope(qkv[:, D + c:D + c + hd]))).astype(jnp.bfloat16)
        v_out[0, h] = qkv[:, 2 * D + c:2 * D + c + hd].astype(jnp.bfloat16)


# ----------------------------------------------------------------------------
# Phase 2: causal online-softmax attention + residual + SwiGLU MLP + slerp
# grid = (batch, query_tile) -- both axes fully parallel.
# ----------------------------------------------------------------------------
def ngpt_attn_mlp_kernel(x_ref, q_ref, k_ref, v_ref, w_o_ref, alpha_a_ref,
                         w_gu_ref, w_down_ref, su_ref, svs_ref, out_ref,
                         *, n_head, head_dim, norm_eps, q_tile, k_tile):
    H, hd, TQ, TK = n_head, head_dim, q_tile, k_tile
    D = x_ref.shape[2]
    F = su_ref.shape[1]
    qi = pl.program_id(1)
    q0 = qi * TQ                                                 # element offset of query tile

    def l2norm(v):
        nrm = jnp.sqrt(jnp.sum(v * v, axis=-1, keepdims=True))
        return v * pl.reciprocal(jnp.maximum(nrm, norm_eps), approx=True)

    qh = q_ref[0]                                                # (H, TQ, hd) bf16 (roped/normed/scaled)

    # ---- online-softmax causal attention over K tiles, skipping masked tiles
    row = lax.broadcasted_iota(jnp.int32, (TQ, TK), 0)           # hoisted out of loop
    col = lax.broadcasted_iota(jnp.int32, (TQ, TK), 1)
    nk = (q0 + TQ + TK - 1) // TK                                # K tiles needed (causal skip)

    def body(ki, carry):
        m, l, acc = carry
        k0 = pl.multiple_of(ki * TK, TK)
        kh = k_ref[0, :, pl.ds(k0, TK), :]                       # (H, TK, hd) bf16
        vh = v_ref[0, :, pl.ds(k0, TK), :]
        s = lax.dot_general(qh, kh,                              # (H, TQ, TK) f32
                            dimension_numbers=(((2,), (2,)), ((0,), (0,))),
                            preferred_element_type=jnp.float32)
        mask = (q0 + row) >= (k0 + col)
        s = jnp.where(mask[None, :, :], s, -1e30)
        m_new = jnp.maximum(m, jnp.max(s, axis=-1, keepdims=True))
        a = jnp.exp(m - m_new)
        p = jnp.exp(s - m_new)
        l_new = a * l + jnp.sum(p, axis=-1, keepdims=True)
        pv = lax.dot_general(p.astype(jnp.bfloat16), vh,         # (H, TQ, hd) f32
                             dimension_numbers=(((2,), (1,)), ((0,), (0,))),
                             preferred_element_type=jnp.float32)
        return m_new, l_new, a * acc + pv

    m0 = jnp.full((H, TQ, 1), -1e30, jnp.float32)
    l0 = jnp.zeros((H, TQ, 1), jnp.float32)
    a0 = jnp.zeros((H, TQ, hd), jnp.float32)
    m, l, acc = lax.fori_loop(0, nk, body, (m0, l0, a0))
    attn_h = (acc * pl.reciprocal(l, approx=True)).astype(jnp.bfloat16)   # (H, TQ, hd)

    # ---- output projection: per-head matmul accumulate vs w_o (H, hd, D);
    # no (TQ, D) scratch store/reload round-trip.
    attn_out = jnp.dot(attn_h[0], w_o_ref[0], preferred_element_type=jnp.float32)
    for h in range(1, H):
        attn_out = attn_out + jnp.dot(attn_h[h], w_o_ref[h],
                                      preferred_element_type=jnp.float32)

    # ---- residual update (|alphaA| pre-folded on host) + L2 norm
    x_t = x_ref[0]                                               # (TQ, D) f32
    x1 = l2norm(x_t + alpha_a_ref[...] * (attn_out - x_t))

    # ---- nGPT SwiGLU MLP (fused gate|up); sqrt(D) pre-folded into sv
    gu = jnp.dot(x1.astype(jnp.bfloat16), w_gu_ref[...],
                 preferred_element_type=jnp.float32)             # (TQ, 2F)
    g = gu[:, :F] * svs_ref[...]
    u = gu[:, F:] * su_ref[...]
    hidden = u * (g * lax.logistic(g))                           # u * silu(g)
    mlp = jnp.dot(hidden.astype(jnp.bfloat16), w_down_ref[...],
                  preferred_element_type=jnp.float32)            # (TQ, D)
    mlp_n = l2norm(mlp)

    # ---- slerp(x1, mlp_n, alpha=0.5): both scales coincide -> scale*(x1+mlp_n)
    d = jnp.clip(jnp.sum(x1 * mlp_n, axis=-1, keepdims=True), -1.0, 1.0)
    sin_omega = jnp.sqrt(jnp.maximum(1.0 - d * d, 0.0))
    sin_omega = jnp.where(sin_omega == 0.0, 1e-8, sin_omega)
    half_sin = jnp.sqrt(jnp.maximum((1.0 - d) * 0.5, 0.0))
    scale = half_sin * pl.reciprocal(sin_omega, approx=True)
    out_ref[0] = (scale * (x1 + mlp_n)).astype(out_ref.dtype)


# ----------------------------------------------------------------------------
# Wrapper
# ----------------------------------------------------------------------------
def _vmem_limit_bytes():
    cap = 128 * 1024 * 1024
    try:
        cap = int(pltpu.get_tpu_info().vmem_capacity_bytes)
    except Exception:
        pass
    # ~48 MiB on v7x (64 MiB physical), ~96 MiB on v5e/v6e (128 MiB physical).
    return min(100 * 1024 * 1024, max(32 * 1024 * 1024, (cap * 3) // 4))


def _const_spec(shape):
    """Constant-index block, single-buffered (never re-fetched)."""
    n = len(shape)
    idx = lambda b, t: (0,) * n
    try:
        return pl.BlockSpec(shape, idx, pipeline_mode=pl.Buffered(1))
    except Exception:                                            # older jax fallback
        return pl.BlockSpec(shape, idx)


def ngpt_block(x, params, *, n_head, head_dim, norm_eps,
               q_tile=None, k_tile=None, t_chunk=None):
    B, T, D = x.shape
    F_ = params["w_up"].shape[1]
    H, hd = n_head, head_dim

    # Tile sizes: large M-dim tiles for MXU utilization; %16 for bf16 sublanes.
    if q_tile is None:
        q_tile = min(256, T)                                     # 128 may be preferable on v5e
    if k_tile is None:
        k_tile = min(512, T)
    if t_chunk is None:
        t_chunk = min(256, T)
    assert T % q_tile == 0 and (q_tile % 16 == 0 or q_tile == T)
    assert T % k_tile == 0 and (k_tile % 16 == 0 or k_tile == T)
    assert T % t_chunk == 0 and (t_chunk % 8 == 0 or t_chunk == T)

    # --- host-side weight / constant prep (once; halves weight DMA, feeds MXU bf16)
    w_qkv = jnp.concatenate([params["w_q"], params["w_k"], params["w_v"]],
                            axis=1).astype(jnp.bfloat16)         # (D, 3D)
    w_o_h = params["w_o"].astype(jnp.bfloat16).reshape(H, hd, D) # (H, hd, D)
    w_gu = jnp.concatenate([params["w_gate"], params["w_up"]],
                           axis=1).astype(jnp.bfloat16)          # (D, 2F)
    w_down = params["w_down"].astype(jnp.bfloat16)               # (F, D)

    half = hd // 2
    sin = params["sin"]
    sin_signed = jnp.concatenate([-sin[:, :half], sin[:, half:]], axis=-1)
    sqk_k = params["sqk"]                                        # (1, D)
    sqk_q = sqk_k * jnp.float32(math.sqrt(hd))                   # sqrt(hd) score scale folded into Q
    alpha_a = jnp.abs(params["alpha_a"])                         # abs folded on host
    svs = params["sv"] * jnp.float32(math.sqrt(D))               # sqrt(D) folded on host

    vmem_limit = _vmem_limit_bytes()

    # ---------------- phase 1: Q/K/V precompute (grid fully parallel) ----------
    pre_kernel = functools.partial(qkv_precompute_kernel, n_head=H,
                                   head_dim=hd, norm_eps=norm_eps)
    qkv_shape = jax.ShapeDtypeStruct((B, H, T, hd), jnp.bfloat16)
    pre_flops = 2 * B * T * D * 3 * D
    pre_bytes = B * T * D * 4 + 2 * 3 * D * D + 3 * B * T * hd * H * 2
    q_c, k_c, v_c = pl.pallas_call(
        pre_kernel,
        out_shape=(qkv_shape, qkv_shape, qkv_shape),
        grid=(B, T // t_chunk),
        in_specs=[
            pl.BlockSpec((1, t_chunk, D), lambda b, t: (b, t, 0)),   # x chunk
            _const_spec((D, 3 * D)),                                 # fused QKV weight
            pl.BlockSpec((t_chunk, hd), lambda b, t: (t, 0)),        # cos chunk
            pl.BlockSpec((t_chunk, hd), lambda b, t: (t, 0)),        # signed sin chunk
            _const_spec((1, D)),                                     # sqrt(hd)*sqk
            _const_spec((1, D)),                                     # sqk
        ],
        out_specs=(pl.BlockSpec((1, H, t_chunk, hd), lambda b, t: (b, 0, t, 0)),
                   pl.BlockSpec((1, H, t_chunk, hd), lambda b, t: (b, 0, t, 0)),
                   pl.BlockSpec((1, H, t_chunk, hd), lambda b, t: (b, 0, t, 0))),
        compiler_params=pltpu.CompilerParams(
            dimension_semantics=("parallel", "parallel"),
            vmem_limit_bytes=vmem_limit),
        cost_estimate=pl.CostEstimate(flops=int(pre_flops),
                                      transcendentals=int(2 * B * T * H),
                                      bytes_accessed=int(pre_bytes)),
    )(x, w_qkv, params["cos"], sin_signed, sqk_q, sqk_k)

    # ---------------- phase 2: attention + MLP + slerp (grid fully parallel) ---
    main_kernel = functools.partial(ngpt_attn_mlp_kernel, n_head=H, head_dim=hd,
                                    norm_eps=norm_eps, q_tile=q_tile,
                                    k_tile=k_tile)
    flops = B * T * (2 * D * D + 6 * D * F_ + 2 * T * D)
    transc = B * T * (H * T // 2 + F_ + 8)
    bytes_acc = (2 * B * T * D * 4 + 3 * B * T * D * 2
                 + 2 * (D * D + 3 * D * F_) + 16 * F_ + 8 * D)
    out = pl.pallas_call(
        main_kernel,
        out_shape=jax.ShapeDtypeStruct((B, T, D), x.dtype),
        grid=(B, T // q_tile),
        in_specs=[
            pl.BlockSpec((1, q_tile, D), lambda b, q: (b, q, 0)),      # x tile (residual)
            pl.BlockSpec((1, H, q_tile, hd), lambda b, q: (b, 0, q, 0)),  # Q tile
            pl.BlockSpec((1, H, T, hd), lambda b, q: (b, 0, 0, 0)),    # K (per batch)
            pl.BlockSpec((1, H, T, hd), lambda b, q: (b, 0, 0, 0)),    # V (per batch)
            _const_spec((H, hd, D)),                                   # w_o head-major
            _const_spec((1, D)),                                       # |alphaA|
            _const_spec((D, 2 * F_)),                                  # w_gate|w_up
            _const_spec((F_, D)),                                      # w_down
            _const_spec((1, F_)),                                      # su
            _const_spec((1, F_)),                                      # sv*sqrt(D)
        ],
        out_specs=pl.BlockSpec((1, q_tile, D), lambda b, q: (b, q, 0)),
        compiler_params=pltpu.CompilerParams(
            dimension_semantics=("parallel", "parallel"),
            vmem_limit_bytes=vmem_limit),
        cost_estimate=pl.CostEstimate(flops=int(flops),
                                      transcendentals=int(transc),
                                      bytes_accessed=int(bytes_acc)),
    )(x, q_c, k_c, v_c, w_o_h, alpha_a, w_gu, w_down, params["su"], svs)
    return out


# ----------------------------------------------------------------------------
# Pure-JAX reference (mirrors the PyTorch forward, f32 throughout).
# ----------------------------------------------------------------------------
def ref_forward(x, p, *, n_head, head_dim, norm_eps):
    B, T, D = x.shape

    def l2norm(v):
        nrm = jnp.sqrt(jnp.sum(v * v, axis=-1, keepdims=True))
        return v / jnp.maximum(nrm, norm_eps)

    q = x @ p["w_q"]
    k = x @ p["w_k"]
    v = x @ p["w_v"]

    def split(t):
        return t.reshape(B, T, n_head, head_dim).transpose(0, 2, 1, 3)

    q, k, v = split(q), split(k), split(v)
    cos = p["cos"][None, None]
    sin = p["sin"][None, None]
    half = head_dim // 2

    def rope(t):
        t1, t2 = t[..., :half], t[..., half:]
        return t * cos + jnp.concatenate([-t2, t1], axis=-1) * sin

    q, k = rope(q), rope(k)
    sqk = p["sqk"][0].reshape(1, n_head, 1, head_dim)
    q = sqk * l2norm(q)
    k = sqk * l2norm(k)

    scores = jnp.einsum("bhqd,bhkd->bhqk", q, k) * math.sqrt(head_dim)
    causal = jnp.tril(jnp.ones((T, T), dtype=bool))
    scores = jnp.where(causal, scores, -1e30)
    attn = jnp.einsum("bhqk,bhkd->bhqd", jax.nn.softmax(scores, axis=-1), v)
    attn = attn.transpose(0, 2, 1, 3).reshape(B, T, D)
    attn_out = attn @ p["w_o"]

    alpha = jnp.abs(p["alpha_a"][0])
    x1 = l2norm(x + alpha * (attn_out - x))

    u = (x1 @ p["w_up"]) * p["su"][0]
    g = (x1 @ p["w_gate"]) * p["sv"][0] * math.sqrt(D)
    mlp = (u * (g * jax.nn.sigmoid(g))) @ p["w_down"]
    mlp_n = l2norm(mlp)

    d = jnp.clip(jnp.sum(x1 * mlp_n, axis=-1, keepdims=True), -1.0, 1.0)
    omega = jnp.arccos(d)
    so = jnp.sin(omega)
    so = jnp.where(so == 0.0, 1e-8, so)
    s = jnp.sin(0.5 * omega) / so
    return s * x1 + s * mlp_n


# ----------------------------------------------------------------------------
# Main
# ----------------------------------------------------------------------------
if __name__ == "__main__":
    # Small config consistent with EfficientNGPTConfig semantics.
    B, T = 2, 32
    n_embd, n_head = 256, 2
    head_dim = n_embd // n_head                                  # 128 (lane width)
    norm_eps = 1e-5
    rope_theta = 10000.0
    ff_intermediate = (int(n_embd * 4 * 2 / 3) + 127) // 128 * 128   # 768

    key = jax.random.PRNGKey(0)
    keys = jax.random.split(key, 8)

    def w(k, shape):
        return 0.02 * jax.random.normal(k, shape, dtype=jnp.float32)

    # Scale() forward returns param * (init_val / init_scale); at init the
    # param equals init_scale * ones, so the effective value is init_val.
    sqk_eff = jnp.full((n_embd,), 1.0, jnp.float32)              # sqk_init_val
    alpha_a_eff = jnp.full((n_embd,), 0.05, jnp.float32)         # attn_alpha_init_val
    su_eff = jnp.full((ff_intermediate,), 1.0, jnp.float32)
    sv_eff = jnp.full((ff_intermediate,), 1.0, jnp.float32)
    # NOTE: alphaM is built in __init__ but forward() uses fixed slerp alpha=0.5.

    # RoPE tables (HF rotate-half convention).
    inv_freq = 1.0 / (rope_theta ** (jnp.arange(0, head_dim, 2,
                                                dtype=jnp.float32) / head_dim))
    pos = jnp.arange(T, dtype=jnp.float32)
    freqs = jnp.outer(pos, inv_freq)                             # (T, head_dim/2)
    cos = jnp.concatenate([jnp.cos(freqs), jnp.cos(freqs)], axis=-1)
    sin = jnp.concatenate([jnp.sin(freqs), jnp.sin(freqs)], axis=-1)

    params = {
        "w_q": w(keys[0], (n_embd, n_embd)),
        "w_k": w(keys[1], (n_embd, n_embd)),
        "w_v": w(keys[2], (n_embd, n_embd)),
        "w_o": w(keys[3], (n_embd, n_embd)),
        "w_gate": w(keys[4], (n_embd, ff_intermediate)),
        "w_up": w(keys[5], (n_embd, ff_intermediate)),
        "w_down": w(keys[6], (ff_intermediate, n_embd)),
        "cos": cos,
        "sin": sin,
        "sqk": sqk_eff.reshape(1, n_embd),
        "alpha_a": alpha_a_eff.reshape(1, n_embd),
        "su": su_eff.reshape(1, ff_intermediate),
        "sv": sv_eff.reshape(1, ff_intermediate),
    }

    x = jax.random.normal(keys[7], (B, T, n_embd), dtype=jnp.float32)

    out = ngpt_block(x, params, n_head=n_head, head_dim=head_dim,
                     norm_eps=norm_eps)
    out = jax.block_until_ready(out)

    ref = jax.block_until_ready(
        ref_forward(x, params, n_head=n_head, head_dim=head_dim,
                    norm_eps=norm_eps))

    assert out.shape == (B, T, n_embd)
    assert bool(jnp.all(jnp.isfinite(out)))
    err = float(jnp.max(jnp.abs(out - ref)))
    # bf16 MXU inputs + EUP approx reciprocals => relaxed-but-tight tolerance
    # vs. the f32 reference (intentional precision tradeoff).
    assert err < 2e-2, err

    print("KERNEL_OK")
</pallas_src>

<mosaic_0001>
module attributes {stable_mosaic.version = 11 : i64} {
  func.func @qkv_precompute_kernel(%arg0: i32, %arg1: i32, %arg2: memref<1x32x256xf32, #tpu.memory_space<vmem>>, %arg3: memref<256x768xbf16, #tpu.memory_space<vmem>>, %arg4: memref<32x128xf32, #tpu.memory_space<vmem>>, %arg5: memref<32x128xf32, #tpu.memory_space<vmem>>, %arg6: memref<1x256xf32, #tpu.memory_space<vmem>>, %arg7: memref<1x256xf32, #tpu.memory_space<vmem>>, %arg8: memref<1x2x32x128xbf16, #tpu.memory_space<vmem>>, %arg9: memref<1x2x32x128xbf16, #tpu.memory_space<vmem>>, %arg10: memref<1x2x32x128xbf16, #tpu.memory_space<vmem>>) attributes {dimension_semantics = [#tpu.dimension_semantics<parallel>, #tpu.dimension_semantics<parallel>], iteration_bounds = array<i64: 2, 1>, scalar_prefetch = 0 : i64, scratch_operands = 0 : i64, tpu.core_type = #tpu.core_type<tc>, window_params = [{transform_indices = @transform_0, window_bounds = array<i64: 1, 32, 256>}, {pipeline_mode = #tpu.pipeline_mode<synchronous>, transform_indices = @transform_1, window_bounds = array<i64: 256, 768>}, {transform_indices = @transform_2, window_bounds = array<i64: 32, 128>}, {transform_indices = @transform_3, window_bounds = array<i64: 32, 128>}, {pipeline_mode = #tpu.pipeline_mode<synchronous>, transform_indices = @transform_4, window_bounds = array<i64: 1, 256>}, {pipeline_mode = #tpu.pipeline_mode<synchronous>, transform_indices = @transform_5, window_bounds = array<i64: 1, 256>}, {transform_indices = @transform_6, window_bounds = array<i64: 1, 2, 32, 128>}, {transform_indices = @transform_7, window_bounds = array<i64: 1, 2, 32, 128>}, {transform_indices = @transform_8, window_bounds = array<i64: 1, 2, 32, 128>}]} {
    %c0 = arith.constant 0 : index
    %c0_0 = arith.constant 0 : index
    %c0_1 = arith.constant 0 : index
    %0 = vector.load %arg2[%c0, %c0_0, %c0_1] : memref<1x32x256xf32, #tpu.memory_space<vmem>>, vector<1x32x256xf32>
    %1 = vector.shape_cast %0 : vector<1x32x256xf32> to vector<32x256xf32>
    %2 = arith.truncf %1 : vector<32x256xf32> to vector<32x256xbf16>
    %c0_2 = arith.constant 0 : index
    %c0_3 = arith.constant 0 : index
    %3 = vector.load %arg3[%c0_2, %c0_3] : memref<256x768xbf16, #tpu.memory_space<vmem>>, vector<256x768xbf16>
    %cst = arith.constant dense<0.000000e+00> : vector<32x768xf32>
    %4 = tpu.matmul %2, %3, %cst {dimension_numbers = #tpu.dot_dimension_numbers<[1], [0], [0], [1], [0, 0, 1, 1], [], []>} : vector<32x256xbf16>, vector<256x768xbf16>, vector<32x768xf32> -> vector<32x768xf32>
    %c0_4 = arith.constant 0 : index
    %c0_5 = arith.constant 0 : index
    %5 = vector.load %arg4[%c0_4, %c0_5] : memref<32x128xf32, #tpu.memory_space<vmem>>, vector<32x128xf32>
    %c0_6 = arith.constant 0 : index
    %c0_7 = arith.constant 0 : index
    %6 = vector.load %arg5[%c0_6, %c0_7] : memref<32x128xf32, #tpu.memory_space<vmem>>, vector<32x128xf32>
    %c0_8 = arith.constant 0 : index
    %c0_9 = arith.constant 0 : index
    %7 = vector.load %arg6[%c0_8, %c0_9] : memref<1x256xf32, #tpu.memory_space<vmem>>, vector<1x128xf32>
    %8 = vector.extract_strided_slice %4 {offsets = [0, 0], sizes = [32, 128], strides = [1, 1]} : vector<32x768xf32> to vector<32x128xf32>
    %9 = arith.mulf %8, %5 : vector<32x128xf32>
    %c64_i32 = arith.constant 64 : i32
    %10 = tpu.dynamic_rotate %8 by %c64_i32 dim 1 : vector<32x128xf32>, i32 -> vector<32x128xf32>
    %11 = arith.mulf %10, %6 : vector<32x128xf32>
    %12 = arith.addf %9, %11 : vector<32x128xf32>
    %13 = arith.mulf %12, %12 : vector<32x128xf32>
    %cst_10 = arith.constant dense<0.000000e+00> : vector<32xf32>
    %14 = vector.multi_reduction <add>, %13, %cst_10 [1] : vector<32x128xf32> to vector<32xf32>
    %15 = vector.shape_cast %14 : vector<32xf32> to vector<32x1xf32>
    %16 = math.sqrt %15 : vector<32x1xf32>
    %cst_11 = arith.constant 9.99999974E-6 : f32
    %17 = vector.broadcast %cst_11 : f32 to vector<32x1xf32>
    %18 = arith.maximumf %16, %17 : vector<32x1xf32>
    %19 = tpu.reciprocal %18 {approx = true} : vector<32x1xf32> -> vector<32x1xf32>
    %20 = vector.broadcast %19 : vector<32x1xf32> to vector<32x128xf32>
    %21 = arith.mulf %12, %20 : vector<32x128xf32>
    %22 = vector.broadcast %7 : vector<1x128xf32> to vector<32x128xf32>
    %23 = arith.mulf %22, %21 : vector<32x128xf32>
    %24 = arith.truncf %23 : vector<32x128xf32> to vector<32x128xbf16>
    %c0_12 = arith.constant 0 : index
    %c0_13 = arith.constant 0 : index
    %c0_14 = arith.constant 0 : index
    %c0_15 = arith.constant 0 : index
    %25 = vector.load %arg8[%c0_12, %c0_13, %c0_14, %c0_15] : memref<1x2x32x128xbf16, #tpu.memory_space<vmem>>, vector<1x1x32x128xbf16>
    %26 = vector.shape_cast %25 : vector<1x1x32x128xbf16> to vector<32x128xbf16>
    %27 = vector.shape_cast %24 : vector<32x128xbf16> to vector<1x1x32x128xbf16>
    tpu.vector_store %arg8[%c0_12, %c0_13, %c0_14, %c0_15], %27 {strides = array<i32>} : memref<1x2x32x128xbf16, #tpu.memory_space<vmem>>, vector<1x1x32x128xbf16>,
    %c0_16 = arith.constant 0 : index
    %c0_17 = arith.constant 0 : index
    %28 = vector.load %arg7[%c0_16, %c0_17] : memref<1x256xf32, #tpu.memory_space<vmem>>, vector<1x128xf32>
    %29 = vector.extract_strided_slice %4 {offsets = [0, 256], sizes = [32, 128], strides = [1, 1]} : vector<32x768xf32> to vector<32x128xf32>
    %30 = arith.mulf %29, %5 : vector<32x128xf32>
    %c64_i32_18 = arith.constant 64 : i32
    %31 = tpu.dynamic_rotate %29 by %c64_i32_18 dim 1 : vector<32x128xf32>, i32 -> vector<32x128xf32>
    %32 = arith.mulf %31, %6 : vector<32x128xf32>
    %33 = arith.addf %30, %32 : vector<32x128xf32>
    %34 = arith.mulf %33, %33 : vector<32x128xf32>
    %cst_19 = arith.constant dense<0.000000e+00> : vector<32xf32>
    %35 = vector.multi_reduction <add>, %34, %cst_19 [1] : vector<32x128xf32> to vector<32xf32>
    %36 = vector.shape_cast %35 : vector<32xf32> to vector<32x1xf32>
    %37 = math.sqrt %36 : vector<32x1xf32>
    %cst_20 = arith.constant 9.99999974E-6 : f32
    %38 = vector.broadcast %cst_20 : f32 to vector<32x1xf32>
    %39 = arith.maximumf %37, %38 : vector<32x1xf32>
    %40 = tpu.reciprocal %39 {approx = true} : vector<32x1xf32> -> vector<32x1xf32>
    %41 = vector.broadcast %40 : vector<32x1xf32> to vector<32x128xf32>
    %42 = arith.mulf %33, %41 : vector<32x128xf32>
    %43 = vector.broadcast %28 : vector<1x128xf32> to vector<32x128xf32>
    %44 = arith.mulf %43, %42 : vector<32x128xf32>
    %45 = arith.truncf %44 : vector<32x128xf32> to vector<32x128xbf16>
    %c0_21 = arith.constant 0 : index
    %c0_22 = arith.constant 0 : index
    %c0_23 = arith.constant 0 : index
    %c0_24 = arith.constant 0 : index
    %46 = vector.load %arg9[%c0_21, %c0_22, %c0_23, %c0_24] : memref<1x2x32x128xbf16, #tpu.memory_space<vmem>>, vector<1x1x32x128xbf16>
    %47 = vector.shape_cast %46 : vector<1x1x32x128xbf16> to vector<32x128xbf16>
    %48 = vector.shape_cast %45 : vector<32x128xbf16> to vector<1x1x32x128xbf16>
    tpu.vector_store %arg9[%c0_21, %c0_22, %c0_23, %c0_24], %48 {strides = array<i32>} : memref<1x2x32x128xbf16, #tpu.memory_space<vmem>>, vector<1x1x32x128xbf16>,
    %49 = vector.extract_strided_slice %4 {offsets = [0, 512], sizes = [32, 128], strides = [1, 1]} : vector<32x768xf32> to vector<32x128xf32>
    %50 = arith.truncf %49 : vector<32x128xf32> to vector<32x128xbf16>
    %c0_25 = arith.constant 0 : index
    %c0_26 = arith.constant 0 : index
    %c0_27 = arith.constant 0 : index
    %c0_28 = arith.constant 0 : index
    %51 = vector.load %arg10[%c0_25, %c0_26, %c0_27, %c0_28] : memref<1x2x32x128xbf16, #tpu.memory_space<vmem>>, vector<1x1x32x128xbf16>
    %52 = vector.shape_cast %51 : vector<1x1x32x128xbf16> to vector<32x128xbf16>
    %53 = vector.shape_cast %50 : vector<32x128xbf16> to vector<1x1x32x128xbf16>
    tpu.vector_store %arg10[%c0_25, %c0_26, %c0_27, %c0_28], %53 {strides = array<i32>} : memref<1x2x32x128xbf16, #tpu.memory_space<vmem>>, vector<1x1x32x128xbf16>,
    %c0_29 = arith.constant 0 : index
    %c128 = arith.constant 128 : index
    %54 = vector.load %arg6[%c0_29, %c128] : memref<1x256xf32, #tpu.memory_space<vmem>>, vector<1x128xf32>
    %55 = vector.extract_strided_slice %4 {offsets = [0, 128], sizes = [32, 128], strides = [1, 1]} : vector<32x768xf32> to vector<32x128xf32>
    %56 = arith.mulf %55, %5 : vector<32x128xf32>
    %c64_i32_30 = arith.constant 64 : i32
    %57 = tpu.dynamic_rotate %55 by %c64_i32_30 dim 1 : vector<32x128xf32>, i32 -> vector<32x128xf32>
    %58 = arith.mulf %57, %6 : vector<32x128xf32>
    %59 = arith.addf %56, %58 : vector<32x128xf32>
    %60 = arith.mulf %59, %59 : vector<32x128xf32>
    %cst_31 = arith.constant dense<0.000000e+00> : vector<32xf32>
    %61 = vector.multi_reduction <add>, %60, %cst_31 [1] : vector<32x128xf32> to vector<32xf32>
    %62 = vector.shape_cast %61 : vector<32xf32> to vector<32x1xf32>
    %63 = math.sqrt %62 : vector<32x1xf32>
    %cst_32 = arith.constant 9.99999974E-6 : f32
    %64 = vector.broadcast %cst_32 : f32 to vector<32x1xf32>
    %65 = arith.maximumf %63, %64 : vector<32x1xf32>
    %66 = tpu.reciprocal %65 {approx = true} : vector<32x1xf32> -> vector<32x1xf32>
    %67 = vector.broadcast %66 : vector<32x1xf32> to vector<32x128xf32>
    %68 = arith.mulf %59, %67 : vector<32x128xf32>
    %69 = vector.broadcast %54 : vector<1x128xf32> to vector<32x128xf32>
    %70 = arith.mulf %69, %68 : vector<32x128xf32>
    %71 = arith.truncf %70 : vector<32x128xf32> to vector<32x128xbf16>
    %c0_33 = arith.constant 0 : index
    %c1 = arith.constant 1 : index
    %c0_34 = arith.constant 0 : index
    %c0_35 = arith.constant 0 : index
    %72 = vector.load %arg8[%c0_33, %c1, %c0_34, %c0_35] : memref<1x2x32x128xbf16, #tpu.memory_space<vmem>>, vector<1x1x32x128xbf16>
    %73 = vector.shape_cast %72 : vector<1x1x32x128xbf16> to vector<32x128xbf16>
    %74 = vector.shape_cast %71 : vector<32x128xbf16> to vector<1x1x32x128xbf16>
    tpu.vector_store %arg8[%c0_33, %c1, %c0_34, %c0_35], %74 {strides = array<i32>} : memref<1x2x32x128xbf16, #tpu.memory_space<vmem>>, vector<1x1x32x128xbf16>,
    %c0_36 = arith.constant 0 : index
    %c128_37 = arith.constant 128 : index
    %75 = vector.load %arg7[%c0_36, %c128_37] : memref<1x256xf32, #tpu.memory_space<vmem>>, vector<1x128xf32>
    %76 = vector.extract_strided_slice %4 {offsets = [0, 384], sizes = [32, 128], strides = [1, 1]} : vector<32x768xf32> to vector<32x128xf32>
    %77 = arith.mulf %76, %5 : vector<32x128xf32>
    %c64_i32_38 = arith.constant 64 : i32
    %78 = tpu.dynamic_rotate %76 by %c64_i32_38 dim 1 : vector<32x128xf32>, i32 -> vector<32x128xf32>
    %79 = arith.mulf %78, %6 : vector<32x128xf32>
    %80 = arith.addf %77, %79 : vector<32x128xf32>
    %81 = arith.mulf %80, %80 : vector<32x128xf32>
    %cst_39 = arith.constant dense<0.000000e+00> : vector<32xf32>
    %82 = vector.multi_reduction <add>, %81, %cst_39 [1] : vector<32x128xf32> to vector<32xf32>
    %83 = vector.shape_cast %82 : vector<32xf32> to vector<32x1xf32>
    %84 = math.sqrt %83 : vector<32x1xf32>
    %cst_40 = arith.constant 9.99999974E-6 : f32
    %85 = vector.broadcast %cst_40 : f32 to vector<32x1xf32>
    %86 = arith.maximumf %84, %85 : vector<32x1xf32>
    %87 = tpu.reciprocal %86 {approx = true} : vector<32x1xf32> -> vector<32x1xf32>
    %88 = vector.broadcast %87 : vector<32x1xf32> to vector<32x128xf32>
    %89 = arith.mulf %80, %88 : vector<32x128xf32>
    %90 = vector.broadcast %75 : vector<1x128xf32> to vector<32x128xf32>
    %91 = arith.mulf %90, %89 : vector<32x128xf32>
    %92 = arith.truncf %91 : vector<32x128xf32> to vector<32x128xbf16>
    %c0_41 = arith.constant 0 : index
    %c1_42 = arith.constant 1 : index
    %c0_43 = arith.constant 0 : index
    %c0_44 = arith.constant 0 : index
    %93 = vector.load %arg9[%c0_41, %c1_42, %c0_43, %c0_44] : memref<1x2x32x128xbf16, #tpu.memory_space<vmem>>, vector<1x1x32x128xbf16>
    %94 = vector.shape_cast %93 : vector<1x1x32x128xbf16> to vector<32x128xbf16>
    %95 = vector.shape_cast %92 : vector<32x128xbf16> to vector<1x1x32x128xbf16>
    tpu.vector_store %arg9[%c0_41, %c1_42, %c0_43, %c0_44], %95 {strides = array<i32>} : memref<1x2x32x128xbf16, #tpu.memory_space<vmem>>, vector<1x1x32x128xbf16>,
    %96 = vector.extract_strided_slice %4 {offsets = [0, 640], sizes = [32, 128], strides = [1, 1]} : vector<32x768xf32> to vector<32x128xf32>
    %97 = arith.truncf %96 : vector<32x128xf32> to vector<32x128xbf16>
    %c0_45 = arith.constant 0 : index
    %c1_46 = arith.constant 1 : index
    %c0_47 = arith.constant 0 : index
    %c0_48 = arith.constant 0 : index
    %98 = vector.load %arg10[%c0_45, %c1_46, %c0_47, %c0_48] : memref<1x2x32x128xbf16, #tpu.memory_space<vmem>>, vector<1x1x32x128xbf16>
    %99 = vector.shape_cast %98 : vector<1x1x32x128xbf16> to vector<32x128xbf16>
    %100 = vector.shape_cast %97 : vector<32x128xbf16> to vector<1x1x32x128xbf16>
    tpu.vector_store %arg10[%c0_45, %c1_46, %c0_47, %c0_48], %100 {strides = array<i32>} : memref<1x2x32x128xbf16, #tpu.memory_space<vmem>>, vector<1x1x32x128xbf16>,
    return
  }
  func.func @transform_0(%arg0: i32, %arg1: i32) -> (i32, i32, i32) {
    %c0_i32 = arith.constant 0 : i32
    %c0_i32_0 = arith.constant 0 : i32
    return %arg0, %arg1, %c0_i32 : i32, i32, i32
  }
  func.func @transform_1(%arg0: i32, %arg1: i32) -> (i32, i32) {
    %c0_i32 = arith.constant 0 : i32
    %c0_i32_0 = arith.constant 0 : i32
    %c0_i32_1 = arith.constant 0 : i32
    return %c0_i32, %c0_i32_0 : i32, i32
  }
  func.func @transform_2(%arg0: i32, %arg1: i32) -> (i32, i32) {
    %c0_i32 = arith.constant 0 : i32
    %c0_i32_0 = arith.constant 0 : i32
    return %arg1, %c0_i32 : i32, i32
  }
  func.func @transform_3(%arg0: i32, %arg1: i32) -> (i32, i32) {
    %c0_i32 = arith.constant 0 : i32
    %c0_i32_0 = arith.constant 0 : i32
    return %arg1, %c0_i32 : i32, i32
  }
  func.func @transform_4(%arg0: i32, %arg1: i32) -> (i32, i32) {
    %c0_i32 = arith.constant 0 : i32
    %c0_i32_0 = arith.constant 0 : i32
    %c0_i32_1 = arith.constant 0 : i32
    return %c0_i32, %c0_i32_0 : i32, i32
  }
  func.func @transform_5(%arg0: i32, %arg1: i32) -> (i32, i32) {
    %c0_i32 = arith.constant 0 : i32
    %c0_i32_0 = arith.constant 0 : i32
    %c0_i32_1 = arith.constant 0 : i32
    return %c0_i32, %c0_i32_0 : i32, i32
  }
  func.func @transform_6(%arg0: i32, %arg1: i32) -> (i32, i32, i32, i32) {
    %c0_i32 = arith.constant 0 : i32
    %c0_i32_0 = arith.constant 0 : i32
    %c0_i32_1 = arith.constant 0 : i32
    return %arg0, %c0_i32, %arg1, %c0_i32_0 : i32, i32, i32, i32
  }
  func.func @transform_7(%arg0: i32, %arg1: i32) -> (i32, i32, i32, i32) {
    %c0_i32 = arith.constant 0 : i32
    %c0_i32_0 = arith.constant 0 : i32
    %c0_i32_1 = arith.constant 0 : i32
    return %arg0, %c0_i32, %arg1, %c0_i32_0 : i32, i32, i32, i32
  }
  func.func @transform_8(%arg0: i32, %arg1: i32) -> (i32, i32, i32, i32) {
    %c0_i32 = arith.constant 0 : i32
    %c0_i32_0 = arith.constant 0 : i32
    %c0_i32_1 = arith.constant 0 : i32
    return %arg0, %c0_i32, %arg1, %c0_i32_0 : i32, i32, i32, i32
  }
}

</mosaic_0001>

<llo_original>
// kernel: tpu_custom_call.1
$region0: #{tpu_custom_call.1}
  #allocation0 [shape = 'u32[]', space=smem, size = 0x4, offset = 0x4, fixed_abs, tag = 'smem constant byte address 0x4 - core index']
  #allocation1 [shape = 'u32[144,128]{1,0:T(1,128)}', space=vmem, size = 0x12000, scoped, tag = 'internal scratch']
  %s0 = inlined_call_operand.hbm [shape: f32[2,32,256], index: 0, kind: input, shape index: {}]
  %s1 = inlined_call_operand.hbm [shape: bf16[256,768], index: 1, kind: input, shape index: {}]
  %s2 = inlined_call_operand.hbm [shape: f32[32,128], index: 2, kind: input, shape index: {}]
  %s3 = inlined_call_operand.hbm [shape: f32[32,128], index: 3, kind: input, shape index: {}]
  %s4 = inlined_call_operand.hbm [shape: f32[1,256], index: 4, kind: input, shape index: {}]
  %s5 = inlined_call_operand.hbm [shape: f32[1,256], index: 5, kind: input, shape index: {}]
  %s6 = inlined_call_operand.hbm [shape: bf16[2,2,32,128], index: 6, kind: output, shape index: {0}]
  %s7 = inlined_call_operand.hbm [shape: bf16[2,2,32,128], index: 7, kind: output, shape index: {1}]
  %s8 = inlined_call_operand.hbm [shape: bf16[2,2,32,128], index: 8, kind: output, shape index: {2}]
  %9 = xla_tuple %s6, %s7, %s8
  %s10 = sld [smem:[#allocation0]]
  $region97: #{tpu_custom_call.1} parent=0
    _
  %s12 = ssub.s32 1, %s10
  %s13 = scalar_select 0, %s12, %s10
  $region1: #{tpu_custom_call.1} parent=0
    #allocation2 [shape = 'u8[65536]{0}', space=vmem, size = 0x10000, scoped, tag = 'input window, operand 0']
    #allocation3 [shape = 's32[2]{0}', space=sflag, size = 0x8, scoped, tag = 'scoped memory for tpu_custom_call.1']
    #allocation4 [shape = 's32[2]{0}', space=sflag, size = 0x8, scoped, tag = 'scoped memory for tpu_custom_call.1']
    #allocation5 [shape = 'u8[393216]{0}', space=vmem, size = 0x60000, scoped, tag = 'input window, operand 1, single buffered']
    #allocation6 [shape = 's32[1]{0}', space=sflag, size = 0x4, scoped, tag = 'scoped memory for tpu_custom_call.1']
    #allocation7 [shape = 'u8[16384]{0}', space=vmem, size = 0x4000, scoped, tag = 'input window, operand 2, single buffered']
    #allocation8 [shape = 'u8[16384]{0}', space=vmem, size = 0x4000, scoped, tag = 'input window, operand 3, single buffered']
    #allocation9 [shape = 's32[1]{0}', space=sflag, size = 0x4, scoped, tag = 'scoped memory for tpu_custom_call.1']
    #allocation10 [shape = 'u8[1024]{0}', space=vmem, size = 0x400, scoped, tag = 'input window, operand 4, single buffered']
    #allocation11 [shape = 'u8[1024]{0}', space=vmem, size = 0x400, scoped, tag = 'input window, operand 5, single buffered']
    #allocation12 [shape = 's32[1]{0}', space=sflag, size = 0x4, scoped, tag = 'scoped memory for tpu_custom_call.1']
    #allocation13 [shape = 'u8[32768]{0}', space=vmem, size = 0x8000, scoped, tag = 'output window, operand 0']
    #allocation14 [shape = 'u8[32768]{0}', space=vmem, size = 0x8000, scoped, tag = 'output window, operand 1']
    #allocation15 [shape = 's32[2]{0}', space=sflag, size = 0x8, scoped, tag = 'scoped memory for tpu_custom_call.1']
    #allocation16 [shape = 'u8[32768]{0}', space=vmem, size = 0x8000, scoped, tag = 'output window, operand 2']
    %14 = vsyncpa [#allocation3], 0
    %s15 = scalar_lea.sflag [#allocation3], 1
    %16 = vsyncpa %s15, 0
    %17 = vsyncpa [#allocation6], 0
    %18 = vsyncpa [#allocation9], 0
    %19 = vsyncpa [#allocation12], 0
    %20 = vsyncpa [#allocation4], 0
    %s21 = scalar_lea.sflag [#allocation4], 1
    %22 = vsyncpa %s21, 0
    %23 = vsyncpa [#allocation15], 0
    %s24 = scalar_lea.sflag [#allocation15], 1
    %25 = vsyncpa %s24, 0
    loop: start=0, step=1, limit=4
    $region2: #{tpu_custom_call.1} parent=1 // loop_pre_header
      _
    $region3: #{tpu_custom_call.1} parent=1 // loop_header
      %s27 = sphi 0, %s31
      %p28 = scmp.ge.s32.totalorder %s27, 4
      %s34 = sphi 0, %s46
      %s35 = sphi 0, %s42
      %s36 = sphi 0, %s34
      %s37 = sphi 0, %s35
      %s38 = sphi 0, %s36
      %s39 = sphi 0, %s37
      %s51 = sphi 0, %s53
      %s54 = sphi 0, %s51
      %s55 = sphi 0, %s54
      %s71 = sphi 0, %s55
      %s75 = sphi 0, %s75
      %s77 = sphi 0, %s75
      %s78 = sphi 0, %s77
      %s92 = sphi 0, %s78
      %s98 = sphi 0, %s100
      %s101 = sphi 0, %s98
      %s102 = sphi 0, %s101
      %s118 = sphi 0, %s102
      %s124 = sphi 0, %s126
      %s127 = sphi 0, %s124
      %s128 = sphi 0, %s127
      %s144 = sphi 0, %s128
      %s148 = sphi 0, %s148
      %s150 = sphi 0, %s148
      %s151 = sphi 0, %s150
      %s165 = sphi 0, %s151
      %s169 = sphi 0, %s169
      %s171 = sphi 0, %s169
      %s172 = sphi 0, %s171
      %s186 = sphi 0, %s172
      %s194 = sphi 0, %s196
      %s197 = sphi 0, %s194
      %s198 = sphi 0, %s197
      %s214 = sphi 0, %s198
      %s222 = sphi 0, %s224
      %s225 = sphi 0, %s222
      %s226 = sphi 0, %s225
      %s242 = sphi 0, %s226
      %s250 = sphi 0, %s252
      %s253 = sphi 0, %s250
      %s254 = sphi 0, %s253
      %s270 = sphi 0, %s254
    $region4: #{tpu_custom_call.1} parent=1 // loop_header_branch
      %30 = sbr.rel (%p28) target = $region8
    $region5: #{tpu_custom_call.1} parent=1 // loop_body
      %s32 = ssub.s32 %s27, 1
      %s33 = ssub.s32 %s27, 2
      %s40 = sadd.s32 1, %s35
      %p41 = scmp.ge.s32.totalorder %s40, 1
      %s42 = scalar_select %p41, 0, %s40
      %s43 = sadd.s32 1, %s34
      %s44 = scalar_select %p41, %s43, %s34
      %p45 = scmp.ge.s32.totalorder %s44, 2
      %s46 = scalar_select %p45, 0, %s44
      %s47 = ssub.s32 %s34, %s46
      %s48 = ssub.s32 %s35, %s42
      %s49 = sor.u32 %s47, %s48
      %p50 = scmp.eq.s32.totalorder %s49, 0
      %s52 = sadd.s32 %s51, 1
      %s53 = scalar_select %p50, %s51, %s52
      %p56 = pneg %p50
      %p57 = scmp.eq.s32.totalorder %s27, 1
      %p58 = por %p56, %p57
      %p59 = scmp.ne.s32.totalorder %s51, %s54
      %p60 = scmp.eq.s32.totalorder %s27, 0
      %p61 = por %p59, %p60
      %p62 = scmp.ne.s32.totalorder %s51, %s54
      %p63 = scmp.eq.s32.totalorder %s32, 1
      %p64 = por %p62, %p63
      %p65 = scmp.ne.s32.totalorder %s54, %s55
      %p66 = scmp.eq.s32.totalorder %s32, 0
      %p67 = por %p65, %p66
      %p68 = scmp.ne.s32.totalorder %s54, %s55
      %p69 = scmp.eq.s32.totalorder %s33, 1
      %p70 = por %p68, %p69
      %p72 = scmp.ne.s32.totalorder %s55, %s71
      %p73 = scmp.eq.s32.totalorder %s33, 0
      %p74 = por %p72, %p73
      %s76 = sadd.s32 %s75, 1
      %p79 = scmp.eq.s32.totalorder %s27, 1
      %p80 = scmp.ne.s32.totalorder %s75, %s77
      %p81 = scmp.eq.s32.totalorder %s27, 0
      %p82 = por %p80, %p81
      %p83 = scmp.ne.s32.totalorder %s75, %s77
      %p84 = scmp.eq.s32.totalorder %s32, 1
      %p85 = por %p83, %p84
      %p86 = scmp.ne.s32.totalorder %s77, %s78
      %p87 = scmp.eq.s32.totalorder %s32, 0
      %p88 = por %p86, %p87
      %p89 = scmp.ne.s32.totalorder %s77, %s78
      %p90 = scmp.eq.s32.totalorder %s33, 1
      %p91 = por %p89, %p90
      %p93 = scmp.ne.s32.totalorder %s78, %s92
      %p94 = scmp.eq.s32.totalorder %s33, 0
      %p95 = por %p93, %p94
      %s96 = ssub.s32 %s35, %s42
      %p97 = scmp.eq.s32.totalorder %s96, 0
      %s99 = sadd.s32 %s98, 1
      %s100 = scalar_select %p97, %s98, %s99
      %p103 = pneg %p97
      %p104 = scmp.eq.s32.totalorder %s27, 1
      %p105 = por %p103, %p104
      %p106 = scmp.ne.s32.totalorder %s98, %s101
      %p107 = scmp.eq.s32.totalorder %s27, 0
      %p108 = por %p106, %p107
      %p109 = scmp.ne.s32.totalorder %s98, %s101
      %p110 = scmp.eq.s32.totalorder %s32, 1
      %p111 = por %p109, %p110
      %p112 = scmp.ne.s32.totalorder %s101, %s102
      %p113 = scmp.eq.s32.totalorder %s32, 0
      %p114 = por %p112, %p113
      %p115 = scmp.ne.s32.totalorder %s101, %s102
      %p116 = scmp.eq.s32.totalorder %s33, 1
      %p117 = por %p115, %p116
      %p119 = scmp.ne.s32.totalorder %s102, %s118
      %p120 = scmp.eq.s32.totalorder %s33, 0
      %p121 = por %p119, %p120
      %s122 = ssub.s32 %s35, %s42
      %p123 = scmp.eq.s32.totalorder %s122, 0
      %s125 = sadd.s32 %s124, 1
      %s126 = scalar_select %p123, %s124, %s125
      %p129 = pneg %p123
      %p130 = scmp.eq.s32.totalorder %s27, 1
      %p131 = por %p129, %p130
      %p132 = scmp.ne.s32.totalorder %s124, %s127
      %p133 = scmp.eq.s32.totalorder %s27, 0
      %p134 = por %p132, %p133
      %p135 = scmp.ne.s32.totalorder %s124, %s127
      %p136 = scmp.eq.s32.totalorder %s32, 1
      %p137 = por %p135, %p136
      %p138 = scmp.ne.s32.totalorder %s127, %s128
      %p139 = scmp.eq.s32.totalorder %s32, 0
      %p140 = por %p138, %p139
      %p141 = scmp.ne.s32.totalorder %s127, %s128
      %p142 = scmp.eq.s32.totalorder %s33, 1
      %p143 = por %p141, %p142
      %p145 = scmp.ne.s32.totalorder %s128, %s144
      %p146 = scmp.eq.s32.totalorder %s33, 0
      %p147 = por %p145, %p146
      %s149 = sadd.s32 %s148, 1
      %p152 = scmp.eq.s32.totalorder %s27, 1
      %p153 = scmp.ne.s32.totalorder %s148, %s150
      %p154 = scmp.eq.s32.totalorder %s27, 0
      %p155 = por %p153, %p154
      %p156 = scmp.ne.s32.totalorder %s148, %s150
      %p157 = scmp.eq.s32.totalorder %s32, 1
      %p158 = por %p156, %p157
      %p159 = scmp.ne.s32.totalorder %s150, %s151
      %p160 = scmp.eq.s32.totalorder %s32, 0
      %p161 = por %p159, %p160
      %p162 = scmp.ne.s32.totalorder %s150, %s151
      %p163 = scmp.eq.s32.totalorder %s33, 1
      %p164 = por %p162, %p163
      %p166 = scmp.ne.s32.totalorder %s151, %s165
      %p167 = scmp.eq.s32.totalorder %s33, 0
      %p168 = por %p166, %p167
      %s170 = sadd.s32 %s169, 1
      %p173 = scmp.eq.s32.totalorder %s27, 1
      %p174 = scmp.ne.s32.totalorder %s169, %s171
      %p175 = scmp.eq.s32.totalorder %s27, 0
      %p176 = por %p174, %p175
      %p177 = scmp.ne.s32.totalorder %s169, %s171
      %p178 = scmp.eq.s32.totalorder %s32, 1
      %p179 = por %p177, %p178
      %p180 = scmp.ne.s32.totalorder %s171, %s172
      %p181 = scmp.eq.s32.totalorder %s32, 0
      %p182 = por %p180, %p181
      %p183 = scmp.ne.s32.totalorder %s171, %s172
      %p184 = scmp.eq.s32.totalorder %s33, 1
      %p185 = por %p183, %p184
      %p187 = scmp.ne.s32.totalorder %s172, %s186
      %p188 = scmp.eq.s32.totalorder %s33, 0
      %p189 = por %p187, %p188
      %s190 = ssub.s32 %s34, %s46
      %s191 = ssub.s32 %s35, %s42
      %s192 = sor.u32 %s190, %s191
      %p193 = scmp.eq.s32.totalorder %s192, 0
      %s195 = sadd.s32 %s194, 1
      %s196 = scalar_select %p193, %s194, %s195
      %p199 = pneg %p193
      %p200 = scmp.eq.s32.totalorder %s27, 1
      %p201 = por %p199, %p200
      %p202 = scmp.ne.s32.totalorder %s194, %s197
      %p203 = scmp.eq.s32.totalorder %s27, 0
      %p204 = por %p202, %p203
      %p205 = scmp.ne.s32.totalorder %s194, %s197
      %p206 = scmp.eq.s32.totalorder %s32, 1
      %p207 = por %p205, %p206
      %p208 = scmp.ne.s32.totalorder %s197, %s198
      %p209 = scmp.eq.s32.totalorder %s32, 0
      %p210 = por %p208, %p209
      %p211 = scmp.ne.s32.totalorder %s197, %s198
      %p212 = scmp.eq.s32.totalorder %s33, 1
      %p213 = por %p211, %p212
      %p215 = scmp.ne.s32.totalorder %s198, %s214
      %p216 = scmp.eq.s32.totalorder %s33, 0
      %p217 = por %p215, %p216
      %s218 = ssub.s32 %s34, %s46
      %s219 = ssub.s32 %s35, %s42
      %s220 = sor.u32 %s218, %s219
      %p221 = scmp.eq.s32.totalorder %s220, 0
      %s223 = sadd.s32 %s222, 1
      %s224 = scalar_select %p221, %s222, %s223
      %p227 = pneg %p221
      %p228 = scmp.eq.s32.totalorder %s27, 1
      %p229 = por %p227, %p228
      %p230 = scmp.ne.s32.totalorder %s222, %s225
      %p231 = scmp.eq.s32.totalorder %s27, 0
      %p232 = por %p230, %p231
      %p233 = scmp.ne.s32.totalorder %s222, %s225
      %p234 = scmp.eq.s32.totalorder %s32, 1
      %p235 = por %p233, %p234
      %p236 = scmp.ne.s32.totalorder %s225, %s226
      %p237 = scmp.eq.s32.totalorder %s32, 0
      %p238 = por %p236, %p237
      %p239 = scmp.ne.s32.totalorder %s225, %s226
      %p240 = scmp.eq.s32.totalorder %s33, 1
      %p241 = por %p239, %p240
      %p243 = scmp.ne.s32.totalorder %s226, %s242
      %p244 = scmp.eq.s32.totalorder %s33, 0
      %p245 = por %p243, %p244
      %s246 = ssub.s32 %s34, %s46
      %s247 = ssub.s32 %s35, %s42
      %s248 = sor.u32 %s246, %s247
      %p249 = scmp.eq.s32.totalorder %s248, 0
      %s251 = sadd.s32 %s250, 1
      %s252 = scalar_select %p249, %s250, %s251
      %p255 = pneg %p249
      %p256 = scmp.eq.s32.totalorder %s27, 1
      %p257 = por %p255, %p256
      %p258 = scmp.ne.s32.totalorder %s250, %s253
      %p259 = scmp.eq.s32.totalorder %s27, 0
      %p260 = por %p258, %p259
      %p261 = scmp.ne.s32.totalorder %s250, %s253
      %p262 = scmp.eq.s32.totalorder %s32, 1
      %p263 = por %p261, %p262
      %p264 = scmp.ne.s32.totalorder %s253, %s254
      %p265 = scmp.eq.s32.totalorder %s32, 0
      %p266 = por %p264, %p265
      %p267 = scmp.ne.s32.totalorder %s253, %s254
      %p268 = scmp.eq.s32.totalorder %s33, 1
      %p269 = por %p267, %p268
      %p271 = scmp.ne.s32.totalorder %s254, %s270
      %p272 = scmp.eq.s32.totalorder %s33, 0
      %p273 = por %p271, %p272
      %p274 = scmp.le.s32.totalorder 1, %s27
      %p275 = scmp.lt.s32.totalorder %s27, 3
      %p276 = pnand %p274, %p275
      %p277 = pneg %p276
      // Predicated region
      $region9: #{tpu_custom_call.1} parent=5 // pred_check
        _
      $region10: #{tpu_custom_call.1} parent=5 // pred_check_branch
        %279 = sbr.rel (%p276) target = $region12
      $region11: #{tpu_custom_call.1} parent=5 // pred_region
        %s280 = ssub.s32 %s27, 1
        // Predicated region
        $region13: #{tpu_custom_call.1} parent=11 // pred_check
          %p281 = pneg %p88
        $region14: #{tpu_custom_call.1} parent=11 // pred_check_branch
          %283 = sbr.rel (%p281) target = $region16
        $region15: #{tpu_custom_call.1} parent=11 // pred_region
          %s285 = ssub.s32 12288, 12288
          %286 = vsyncadd [#allocation6], %s285
          %s287 = sshll.u32 [#allocation5], 4
          %s288 = int_to_ptr.vmem [resolvable:$true] %s287
          %293 = dma.hbm_to_vmem [thread:$0]  %s1, 12288, %s288, [#allocation6], 384, 384, 24
        $region16: #{tpu_custom_call.1} parent=11 // pred_fallthru
          _
        // Predicated region
        $region17: #{tpu_custom_call.1} parent=11 // pred_check
          %p294 = pneg %p114
        $region18: #{tpu_custom_call.1} parent=11 // pred_check_branch
          %296 = sbr.rel (%p294) target = $region20
        $region19: #{tpu_custom_call.1} parent=11 // pred_region
          %s297 = smul.u32 4, %s37
          %s299 = ssub.s32 512, 512
          %300 = vsyncadd [#allocation6], %s299
          %s301 = smul.addr %s297, 128
          %s302 = scalar_lea.hbm %s2, %s301
          %s303 = sshll.u32 [#allocation7], 4
          %s304 = int_to_ptr.vmem [resolvable:$true] %s303
          %309 = dma.hbm_to_vmem [thread:$0]  %s302, 512, %s304, [#allocation6], 128, 128, 8
        $region20: #{tpu_custom_call.1} parent=11 // pred_fallthru
          _
        // Predicated region
        $region21: #{tpu_custom_call.1} parent=11 // pred_check
          %p310 = pneg %p140
        $region22: #{tpu_custom_call.1} parent=11 // pred_check_branch
          %312 = sbr.rel (%p310) target = $region24
        $region23: #{tpu_custom_call.1} parent=11 // pred_region
          %s313 = smul.u32 4, %s37
          %s315 = ssub.s32 512, 512
          %316 = vsyncadd [#allocation9], %s315
          %s317 = smul.addr %s313, 128
          %s318 = scalar_lea.hbm %s3, %s317
          %s319 = sshll.u32 [#allocation8], 4
          %s320 = int_to_ptr.vmem [resolvable:$true] %s319
          %325 = dma.hbm_to_vmem [thread:$0]  %s318, 512, %s320, [#allocation9], 128, 128, 8
        $region24: #{tpu_custom_call.1} parent=11 // pred_fallthru
          _
        // Predicated region
        $region25: #{tpu_custom_call.1} parent=11 // pred_check
          %p326 = pneg %p161
        $region26: #{tpu_custom_call.1} parent=11 // pred_check_branch
          %328 = sbr.rel (%p326) target = $region28
        $region27: #{tpu_custom_call.1} parent=11 // pred_region
          %s330 = ssub.s32 32, 32
          %331 = vsyncadd [#allocation9], %s330
          %s333 = sshll.u32 [#allocation10], 4
          %s334 = int_to_ptr.vmem [resolvable:$true] %s333
          %336 = dma.hbm_to_vmem [thread:$0]  %s4, 32, %s334, [#allocation9]
        $region28: #{tpu_custom_call.1} parent=11 // pred_fallthru
          _
        // Predicated region
        $region29: #{tpu_custom_call.1} parent=11 // pred_check
          %p337 = pneg %p182
        $region30: #{tpu_custom_call.1} parent=11 // pred_check_branch
          %339 = sbr.rel (%p337) target = $region32
        $region31: #{tpu_custom_call.1} parent=11 // pred_region
          %s341 = ssub.s32 32, 32
          %342 = vsyncadd [#allocation12], %s341
          %s344 = sshll.u32 [#allocation11], 4
          %s345 = int_to_ptr.vmem [resolvable:$true] %s344
          %347 = dma.hbm_to_vmem [thread:$0]  %s5, 32, %s345, [#allocation12]
        $region32: #{tpu_custom_call.1} parent=11 // pred_fallthru
          _
      $region12: #{tpu_custom_call.1} parent=5 // pred_fallthru
        _
      %p348 = scmp.lt.s32.totalorder %s27, 2
      // Predicated region
      $region33: #{tpu_custom_call.1} parent=5 // pred_check
        %p349 = pneg %p348
      $region34: #{tpu_custom_call.1} parent=5 // pred_check_branch
        %351 = sbr.rel (%p349) target = $region36
      $region35: #{tpu_custom_call.1} parent=5 // pred_region
        // Predicated region
        $region37: #{tpu_custom_call.1} parent=35 // pred_check
          %p352 = pneg %p61
        $region38: #{tpu_custom_call.1} parent=35 // pred_check_branch
          %354 = sbr.rel (%p352) target = $region40
        $region39: #{tpu_custom_call.1} parent=35 // pred_region
          %s355 = sand.u32 %s51, 1
          %s356 = scalar_lea.sflag [#allocation3], %s355
          %s357 = sand.u32 %s51, 1
          %s358 = smul.addr %s357, 64
          %s359 = scalar_lea.vmem [#allocation2], %s358
          %s360 = smul.u32 4, %s35
          %s362 = ssub.s32 1024, 1024
          %363 = vsyncadd %s356, %s362
          %s364 = smul.addr %s360, 2
          %s365 = smul.addr %s34, 8
          %s366 = sadd.s32 %s364, %s365
          %s367 = smul.addr %s366, 128
          %s368 = scalar_lea.hbm %s0, %s367
          %s369 = sshll.u32 %s359, 4
          %s370 = int_to_ptr.vmem [resolvable:$true] %s369
          %375 = dma.hbm_to_vmem [thread:$0]  %s368, 1024, %s370, %s356, 256, 256, 16
        $region40: #{tpu_custom_call.1} parent=35 // pred_fallthru
          _
      $region36: #{tpu_custom_call.1} parent=5 // pred_fallthru
        _
      %p376 = scmp.le.s32.totalorder 1, %s27
      %p377 = scmp.lt.s32.totalorder %s27, 3
      %p378 = pnand %p376, %p377
      %p379 = pneg %p378
      // Predicated region
      $region41: #{tpu_custom_call.1} parent=5 // pred_check
        _
      $region42: #{tpu_custom_call.1} parent=5 // pred_check_branch
        %381 = sbr.rel (%p378) target = $region44
      $region43: #{tpu_custom_call.1} parent=5 // pred_region
        %s382 = ssub.s32 %s27, 1
        %s383 = sand.u32 %s54, 1
        %s384 = scalar_lea.sflag [#allocation3], %s383
        %s385 = sand.u32 %s54, 1
        %s386 = smul.addr %s385, 64
        %s387 = scalar_lea.vmem [#allocation2], %s386
        // Predicated region
        $region45: #{tpu_custom_call.1} parent=43 // pred_check
          %p388 = pneg %p67
        $region46: #{tpu_custom_call.1} parent=43 // pred_check_branch
          %390 = sbr.rel (%p388) target = $region48
        $region47: #{tpu_custom_call.1} parent=43 // pred_region
          %391 = dma.done %s384, 1024
        $region48: #{tpu_custom_call.1} parent=43 // pred_fallthru
          _
        // Predicated region
        $region49: #{tpu_custom_call.1} parent=43 // pred_check
          %p392 = pneg %p88
        $region50: #{tpu_custom_call.1} parent=43 // pred_check_branch
          %394 = sbr.rel (%p392) target = $region52
        $region51: #{tpu_custom_call.1} parent=43 // pred_region
          %395 = dma.done [#allocation6], 12288
        $region52: #{tpu_custom_call.1} parent=43 // pred_fallthru
          _
        // Predicated region
        $region53: #{tpu_custom_call.1} parent=43 // pred_check
          %p396 = pneg %p114
        $region54: #{tpu_custom_call.1} parent=43 // pred_check_branch
          %398 = sbr.rel (%p396) target = $region56
        $region55: #{tpu_custom_call.1} parent=43 // pred_region
          %399 = dma.done [#allocation6], 512
        $region56: #{tpu_custom_call.1} parent=43 // pred_fallthru
          _
        // Predicated region
        $region57: #{tpu_custom_call.1} parent=43 // pred_check
          %p400 = pneg %p140
        $region58: #{tpu_custom_call.1} parent=43 // pred_check_branch
          %402 = sbr.rel (%p400) target = $region60
        $region59: #{tpu_custom_call.1} parent=43 // pred_region
          %403 = dma.done [#allocation9], 512
        $region60: #{tpu_custom_call.1} parent=43 // pred_fallthru
          _
        // Predicated region
        $region61: #{tpu_custom_call.1} parent=43 // pred_check
          %p404 = pneg %p161
        $region62: #{tpu_custom_call.1} parent=43 // pred_check_branch
          %406 = sbr.rel (%p404) target = $region64
        $region63: #{tpu_custom_call.1} parent=43 // pred_region
          %407 = dma.done [#allocation9], 32
        $region64: #{tpu_custom_call.1} parent=43 // pred_fallthru
          _
        // Predicated region
        $region65: #{tpu_custom_call.1} parent=43 // pred_check
          %p408 = pneg %p182
        $region66: #{tpu_custom_call.1} parent=43 // pred_check_branch
          %410 = sbr.rel (%p408) target = $region68
        $region67: #{tpu_custom_call.1} parent=43 // pred_region
          %411 = dma.done [#allocation12], 32
        $region68: #{tpu_custom_call.1} parent=43 // pred_fallthru
          _
        %s412 = sand.u32 %s54, 1
        %s413 = scalar_lea.sflag [#allocation3], %s412
        %s414 = sand.u32 %s54, 1
        %s415 = smul.addr %s414, 64
        %s416 = scalar_lea.vmem [#allocation2], %s415
        %p417 = pneg %p67
        %p418 = pneg %p64
        %p419 = pneg %p88
        %p420 = pneg %p85
        %p421 = pneg %p114
        %p422 = pneg %p111
        %p423 = pneg %p140
        %p424 = pneg %p137
        %p425 = pneg %p161
        %p426 = pneg %p158
        %p427 = pneg %p182
        %p428 = pneg %p179
        %p429 = pneg %p210
        %p430 = pneg %p207
        %s431 = sand.u32 %s197, 1
        %s432 = scalar_lea.sflag [#allocation4], %s431
        %s433 = sand.u32 %s197, 1
        %s434 = smul.addr %s433, 32
        %s435 = scalar_lea.vmem [#allocation13], %s434
        %p436 = pneg %p238
        %p437 = pneg %p235
        %s438 = sand.u32 %s32, 1
        %s439 = scalar_lea.sflag [#allocation15], %s438
        %s440 = sand.u32 %s225, 1
        %s441 = smul.addr %s440, 32
        %s442 = scalar_lea.vmem [#allocation14], %s441
        %p443 = pneg %p266
        %p444 = pneg %p263
        %s445 = sand.u32 %s32, 1
        %s446 = scalar_lea.sflag [#allocation15], %s445
        %s447 = sand.u32 %s253, 1
        %s448 = smul.addr %s447, 32
        %s449 = scalar_lea.vmem [#allocation16], %s448
        %s450 = smul.u32 4, %s37
        %s451 = smul.u32 4, %s37
        %s452 = smul.u32 4, %s37
        %s453 = smul.u32 4, %s37
        %s454 = smul.u32 4, %s37
        %s455 = smul.u32 4, %s37
        %v456 = vld [vmem:[%s387] sm:$0xff]
        %v457 = vld [vmem:[%s387 + $0x8] sm:$0xff]
        %v458 = vld [vmem:[%s387 + $0x10] sm:$0xff]
        %v459 = vld [vmem:[%s387 + $0x18] sm:$0xff]
        %v460 = vld [vmem:[%s387 + $0x20] sm:$0xff]
        %v461 = vld [vmem:[%s387 + $0x28] sm:$0xff]
        %v462 = vld [vmem:[%s387 + $0x30] sm:$0xff]
        %v463 = vld [vmem:[%s387 + $0x38] sm:$0xff]
        %v464 = vpack.c.bf16 %v458, %v456
        %v465 = vpack.c.bf16 %v459, %v457
        %v466 = vpack.c.bf16 %v462, %v460
        %v467 = vpack.c.bf16 %v463, %v461
        %v468 = vld [vmem:[#allocation5] sm:$0xff]
        %v469 = vld [vmem:[#allocation5 + $0x8] sm:$0xff]
        %v470 = vld [vmem:[#allocation5 + $0x10] sm:$0xff]
        %v471 = vld [vmem:[#allocation5 + $0x18] sm:$0xff]
        %v472 = vld [vmem:[#allocation5 + $0x20] sm:$0xff]
        %v473 = vld [vmem:[#allocation5 + $0x28] sm:$0xff]
        %v474 = vld [vmem:[#allocation5 + $0x30] sm:$0xff]
        %v475 = vld [vmem:[#allocation5 + $0x38] sm:$0xff]
        %v476 = vld [vmem:[#allocation5 + $0x40] sm:$0xff]
        %v477 = vld [vmem:[#allocation5 + $0x48] sm:$0xff]
        %v478 = vld [vmem:[#allocation5 + $0x50] sm:$0xff]
        %v479 = vld [vmem:[#allocation5 + $0x58] sm:$0xff]
        %v480 = vld [vmem:[#allocation5 + $0x60] sm:$0xff]
        %v481 = vld [vmem:[#allocation5 + $0x68] sm:$0xff]
        %v482 = vld [vmem:[#allocation5 + $0x70] sm:$0xff]
        %v483 = vld [vmem:[#allocation5 + $0x78] sm:$0xff]
        %v484 = vld [vmem:[#allocation5 + $0x80] sm:$0xff]
        %v485 = vld [vmem:[#allocation5 + $0x88] sm:$0xff]
        %v486 = vld [vmem:[#allocation5 + $0x90] sm:$0xff]
        %v487 = vld [vmem:[#allocation5 + $0x98] sm:$0xff]
        %v488 = vld [vmem:[#allocation5 + $0xa0] sm:$0xff]
        %v489 = vld [vmem:[#allocation5 + $0xa8] sm:$0xff]
        %v490 = vld [vmem:[#allocation5 + $0xb0] sm:$0xff]
        %v491 = vld [vmem:[#allocation5 + $0xb8] sm:$0xff]
        %v492 = vld [vmem:[#allocation5 + $0xc0] sm:$0xff]
        %v493 = vld [vmem:[#allocation5 + $0xc8] sm:$0xff]
        %v494 = vld [vmem:[#allocation5 + $0xd0] sm:$0xff]
        %v495 = vld [vmem:[#allocation5 + $0xd8] sm:$0xff]
        %v496 = vld [vmem:[#allocation5 + $0xe0] sm:$0xff]
        %v497 = vld [vmem:[#allocation5 + $0xe8] sm:$0xff]
        %v498 = vld [vmem:[#allocation5 + $0xf0] sm:$0xff]
        %v499 = vld [vmem:[#allocation5 + $0xf8] sm:$0xff]
        %v500 = vld [vmem:[#allocation5 + $0x100] sm:$0xff]
        %v501 = vld [vmem:[#allocation5 + $0x108] sm:$0xff]
        %v502 = vld [vmem:[#allocation5 + $0x110] sm:$0xff]
        %v503 = vld [vmem:[#allocation5 + $0x118] sm:$0xff]
        %v504 = vld [vmem:[#allocation5 + $0x120] sm:$0xff]
        %v505 = vld [vmem:[#allocation5 + $0x128] sm:$0xff]
        %v506 = vld [vmem:[#allocation5 + $0x130] sm:$0xff]
        %v507 = vld [vmem:[#allocation5 + $0x138] sm:$0xff]
        %v508 = vld [vmem:[#allocation5 + $0x140] sm:$0xff]
        %v509 = vld [vmem:[#allocation5 + $0x148] sm:$0xff]
        %v510 = vld [vmem:[#allocation5 + $0x150] sm:$0xff]
        %v511 = vld [vmem:[#allocation5 + $0x158] sm:$0xff]
        %v512 = vld [vmem:[#allocation5 + $0x160] sm:$0xff]
        %v513 = vld [vmem:[#allocation5 + $0x168] sm:$0xff]
        %v514 = vld [vmem:[#allocation5 + $0x170] sm:$0xff]
        %v515 = vld [vmem:[#allocation5 + $0x178] sm:$0xff]
        %v516 = vld [vmem:[#allocation5 + $0x180] sm:$0xff]
        %v517 = vld [vmem:[#allocation5 + $0x188] sm:$0xff]
        %v518 = vld [vmem:[#allocation5 + $0x190] sm:$0xff]
        %v519 = vld [vmem:[#allocation5 + $0x198] sm:$0xff]
        %v520 = vld [vmem:[#allocation5 + $0x1a0] sm:$0xff]
        %v521 = vld [vmem:[#allocation5 + $0x1a8] sm:$0xff]
        %v522 = vld [vmem:[#allocation5 + $0x1b0] sm:$0xff]
        %v523 = vld [vmem:[#allocation5 + $0x1b8] sm:$0xff]
        %v524 = vld [vmem:[#allocation5 + $0x1c0] sm:$0xff]
        %v525 = vld [vmem:[#allocation5 + $0x1c8] sm:$0xff]
        %v526 = vld [vmem:[#allocation5 + $0x1d0] sm:$0xff]
        %v527 = vld [vmem:[#allocation5 + $0x1d8] sm:$0xff]
        %v528 = vld [vmem:[#allocation5 + $0x1e0] sm:$0xff]
        %v529 = vld [vmem:[#allocation5 + $0x1e8] sm:$0xff]
        %v530 = vld [vmem:[#allocation5 + $0x1f0] sm:$0xff]
        %v531 = vld [vmem:[#allocation5 + $0x1f8] sm:$0xff]
        %v532 = vld [vmem:[#allocation5 + $0x200] sm:$0xff]
        %v533 = vld [vmem:[#allocation5 + $0x208] sm:$0xff]
        %v534 = vld [vmem:[#allocation5 + $0x210] sm:$0xff]
        %v535 = vld [vmem:[#allocation5 + $0x218] sm:$0xff]
        %v536 = vld [vmem:[#allocation5 + $0x220] sm:$0xff]
        %v537 = vld [vmem:[#allocation5 + $0x228] sm:$0xff]
        %v538 = vld [vmem:[#allocation5 + $0x230] sm:$0xff]
        %v539 = vld [vmem:[#allocation5 + $0x238] sm:$0xff]
        %v540 = vld [vmem:[#allocation5 + $0x240] sm:$0xff]
        %v541 = vld [vmem:[#allocation5 + $0x248] sm:$0xff]
        %v542 = vld [vmem:[#allocation5 + $0x250] sm:$0xff]
        %v543 = vld [vmem:[#allocation5 + $0x258] sm:$0xff]
        %v544 = vld [vmem:[#allocation5 + $0x260] sm:$0xff]
        %v545 = vld [vmem:[#allocation5 + $0x268] sm:$0xff]
        %v546 = vld [vmem:[#allocation5 + $0x270] sm:$0xff]
        %v547 = vld [vmem:[#allocation5 + $0x278] sm:$0xff]
        %v548 = vld [vmem:[#allocation5 + $0x280] sm:$0xff]
        %v549 = vld [vmem:[#allocation5 + $0x288] sm:$0xff]
        %v550 = vld [vmem:[#allocation5 + $0x290] sm:$0xff]
        %v551 = vld [vmem:[#allocation5 + $0x298] sm:$0xff]
        %v552 = vld [vmem:[#allocation5 + $0x2a0] sm:$0xff]
        %v553 = vld [vmem:[#allocation5 + $0x2a8] sm:$0xff]
        %v554 = vld [vmem:[#allocation5 + $0x2b0] sm:$0xff]
        %v555 = vld [vmem:[#allocation5 + $0x2b8] sm:$0xff]
        %v556 = vld [vmem:[#allocation5 + $0x2c0] sm:$0xff]
        %v557 = vld [vmem:[#allocation5 + $0x2c8] sm:$0xff]
        %v558 = vld [vmem:[#allocation5 + $0x2d0] sm:$0xff]
        %v559 = vld [vmem:[#allocation5 + $0x2d8] sm:$0xff]
        %v560 = vld [vmem:[#allocation5 + $0x2e0] sm:$0xff]
        %v561 = vld [vmem:[#allocation5 + $0x2e8] sm:$0xff]
        %v562 = vld [vmem:[#allocation5 + $0x2f0] sm:$0xff]
        %v563 = vld [vmem:[#allocation5 + $0x2f8] sm:$0xff]
        %v660 = vunpack.c.l.b16 %v468
        %v661 = vunpack.c.h.b16 %v468
        %v662 = vunpack.c.l.b16 %v469
        %v663 = vunpack.c.h.b16 %v469
        %v664 = vunpack.c.l.b16 %v470
        %v665 = vunpack.c.h.b16 %v470
        %v666 = vunpack.c.l.b16 %v471
        %v667 = vunpack.c.h.b16 %v471
        %v668 = vunpack.c.l.b16 %v472
        %v669 = vunpack.c.h.b16 %v472
        %v670 = vunpack.c.l.b16 %v473
        %v671 = vunpack.c.h.b16 %v473
        %v672 = vunpack.c.l.b16 %v474
        %v673 = vunpack.c.h.b16 %v474
        %v674 = vunpack.c.l.b16 %v475
        %v675 = vunpack.c.h.b16 %v475
        %v676 = vunpack.c.l.b16 %v476
        %v677 = vunpack.c.h.b16 %v476
        %v678 = vunpack.c.l.b16 %v477
        %v679 = vunpack.c.h.b16 %v477
        %v680 = vunpack.c.l.b16 %v478
        %v681 = vunpack.c.h.b16 %v478
        %v682 = vunpack.c.l.b16 %v479
        %v683 = vunpack.c.h.b16 %v479
        %v684 = vunpack.c.l.b16 %v480
        %v685 = vunpack.c.h.b16 %v480
        %v686 = vunpack.c.l.b16 %v481
        %v687 = vunpack.c.h.b16 %v481
        %v688 = vunpack.c.l.b16 %v482
        %v689 = vunpack.c.h.b16 %v482
        %v690 = vunpack.c.l.b16 %v483
        %v691 = vunpack.c.h.b16 %v483
        %v692 = vunpack.c.l.b16 %v484
        %v693 = vunpack.c.h.b16 %v484
        %v694 = vunpack.c.l.b16 %v485
        %v695 = vunpack.c.h.b16 %v485
        %v696 = vunpack.c.l.b16 %v486
        %v697 = vunpack.c.h.b16 %v486
        %v698 = vunpack.c.l.b16 %v487
        %v699 = vunpack.c.h.b16 %v487
        %v700 = vunpack.c.l.b16 %v488
        %v701 = vunpack.c.h.b16 %v488
        %v702 = vunpack.c.l.b16 %v489
        %v703 = vunpack.c.h.b16 %v489
        %v704 = vunpack.c.l.b16 %v490
        %v705 = vunpack.c.h.b16 %v490
        %v706 = vunpack.c.l.b16 %v491
        %v707 = vunpack.c.h.b16 %v491
        %v708 = vunpack.c.l.b16 %v492
        %v709 = vunpack.c.h.b16 %v492
        %v710 = vunpack.c.l.b16 %v493
        %v711 = vunpack.c.h.b16 %v493
        %v712 = vunpack.c.l.b16 %v494
        %v713 = vunpack.c.h.b16 %v494
        %v714 = vunpack.c.l.b16 %v495
        %v715 = vunpack.c.h.b16 %v495
        %v716 = vunpack.c.l.b16 %v496
        %v717 = vunpack.c.h.b16 %v496
        %v718 = vunpack.c.l.b16 %v497
        %v719 = vunpack.c.h.b16 %v497
        %v720 = vunpack.c.l.b16 %v498
        %v721 = vunpack.c.h.b16 %v498
        %v722 = vunpack.c.l.b16 %v499
        %v723 = vunpack.c.h.b16 %v499
        %v724 = vunpack.c.l.b16 %v500
        %v725 = vunpack.c.h.b16 %v500
        %v726 = vunpack.c.l.b16 %v501
        %v727 = vunpack.c.h.b16 %v501
        %v728 = vunpack.c.l.b16 %v502
        %v729 = vunpack.c.h.b16 %v502
        %v730 = vunpack.c.l.b16 %v503
        %v731 = vunpack.c.h.b16 %v503
        %v732 = vunpack.c.l.b16 %v504
        %v733 = vunpack.c.h.b16 %v504
        %v734 = vunpack.c.l.b16 %v505
        %v735 = vunpack.c.h.b16 %v505
        %v736 = vunpack.c.l.b16 %v506
        %v737 = vunpack.c.h.b16 %v506
        %v738 = vunpack.c.l.b16 %v507
        %v739 = vunpack.c.h.b16 %v507
        %v740 = vunpack.c.l.b16 %v508
        %v741 = vunpack.c.h.b16 %v508
        %v742 = vunpack.c.l.b16 %v509
        %v743 = vunpack.c.h.b16 %v509
        %v744 = vunpack.c.l.b16 %v510
        %v745 = vunpack.c.h.b16 %v510
        %v746 = vunpack.c.l.b16 %v511
        %v747 = vunpack.c.h.b16 %v511
        %v748 = vunpack.c.l.b16 %v512
        %v749 = vunpack.c.h.b16 %v512
        %v750 = vunpack.c.l.b16 %v513
        %v751 = vunpack.c.h.b16 %v513
        %v752 = vunpack.c.l.b16 %v514
        %v753 = vunpack.c.h.b16 %v514
        %v754 = vunpack.c.l.b16 %v515
        %v755 = vunpack.c.h.b16 %v515
        %v756 = vunpack.c.l.b16 %v516
        %v757 = vunpack.c.h.b16 %v516
        %v758 = vunpack.c.l.b16 %v517
        %v759 = vunpack.c.h.b16 %v517
        %v760 = vunpack.c.l.b16 %v518
        %v761 = vunpack.c.h.b16 %v518
        %v762 = vunpack.c.l.b16 %v519
        %v763 = vunpack.c.h.b16 %v519
        %v764 = vunpack.c.l.b16 %v520
        %v765 = vunpack.c.h.b16 %v520
        %v766 = vunpack.c.l.b16 %v521
        %v767 = vunpack.c.h.b16 %v521
        %v768 = vunpack.c.l.b16 %v522
        %v769 = vunpack.c.h.b16 %v522
        %v770 = vunpack.c.l.b16 %v523
        %v771 = vunpack.c.h.b16 %v523
        %v772 = vunpack.c.l.b16 %v524
        %v773 = vunpack.c.h.b16 %v524
        %v774 = vunpack.c.l.b16 %v525
        %v775 = vunpack.c.h.b16 %v525
        %v776 = vunpack.c.l.b16 %v526
        %v777 = vunpack.c.h.b16 %v526
        %v778 = vunpack.c.l.b16 %v527
        %v779 = vunpack.c.h.b16 %v527
        %v780 = vunpack.c.l.b16 %v528
        %v781 = vunpack.c.h.b16 %v528
        %v782 = vunpack.c.l.b16 %v529
        %v783 = vunpack.c.h.b16 %v529
        %v784 = vunpack.c.l.b16 %v530
        %v785 = vunpack.c.h.b16 %v530
        %v786 = vunpack.c.l.b16 %v531
        %v787 = vunpack.c.h.b16 %v531
        %v788 = vunpack.c.l.b16 %v532
        %v789 = vunpack.c.h.b16 %v532
        %v790 = vunpack.c.l.b16 %v533
        %v791 = vunpack.c.h.b16 %v533
        %v792 = vunpack.c.l.b16 %v534
        %v793 = vunpack.c.h.b16 %v534
        %v794 = vunpack.c.l.b16 %v535
        %v795 = vunpack.c.h.b16 %v535
        %v796 = vunpack.c.l.b16 %v536
        %v797 = vunpack.c.h.b16 %v536
        %v798 = vunpack.c.l.b16 %v537
        %v799 = vunpack.c.h.b16 %v537
        %v800 = vunpack.c.l.b16 %v538
        %v801 = vunpack.c.h.b16 %v538
        %v802 = vunpack.c.l.b16 %v539
        %v803 = vunpack.c.h.b16 %v539
        %v804 = vunpack.c.l.b16 %v540
        %v805 = vunpack.c.h.b16 %v540
        %v806 = vunpack.c.l.b16 %v541
        %v807 = vunpack.c.h.b16 %v541
        %v808 = vunpack.c.l.b16 %v542
        %v809 = vunpack.c.h.b16 %v542
        %v810 = vunpack.c.l.b16 %v543
        %v811 = vunpack.c.h.b16 %v543
        %v812 = vunpack.c.l.b16 %v544
        %v813 = vunpack.c.h.b16 %v544
        %v814 = vunpack.c.l.b16 %v545
        %v815 = vunpack.c.h.b16 %v545
        %v816 = vunpack.c.l.b16 %v546
        %v817 = vunpack.c.h.b16 %v546
        %v818 = vunpack.c.l.b16 %v547
        %v819 = vunpack.c.h.b16 %v547
        %v820 = vunpack.c.l.b16 %v548
        %v821 = vunpack.c.h.b16 %v548
        %v822 = vunpack.c.l.b16 %v549
        %v823 = vunpack.c.h.b16 %v549
        %v824 = vunpack.c.l.b16 %v550
        %v825 = vunpack.c.h.b16 %v550
        %v826 = vunpack.c.l.b16 %v551
        %v827 = vunpack.c.h.b16 %v551
        %v828 = vunpack.c.l.b16 %v552
        %v829 = vunpack.c.h.b16 %v552
        %v830 = vunpack.c.l.b16 %v553
        %v831 = vunpack.c.h.b16 %v553
        %v832 = vunpack.c.l.b16 %v554
        %v833 = vunpack.c.h.b16 %v554
        %v834 = vunpack.c.l.b16 %v555
        %v835 = vunpack.c.h.b16 %v555
        %v836 = vunpack.c.l.b16 %v556
        %v837 = vunpack.c.h.b16 %v556
        %v838 = vunpack.c.l.b16 %v557
        %v839 = vunpack.c.h.b16 %v557
        %v840 = vunpack.c.l.b16 %v558
        %v841 = vunpack.c.h.b16 %v558
        %v842 = vunpack.c.l.b16 %v559
        %v843 = vunpack.c.h.b16 %v559
        %v844 = vunpack.c.l.b16 %v560
        %v845 = vunpack.c.h.b16 %v560
        %v846 = vunpack.c.l.b16 %v561
        %v847 = vunpack.c.h.b16 %v561
        %v848 = vunpack.c.l.b16 %v562
        %v849 = vunpack.c.h.b16 %v562
        %v850 = vunpack.c.l.b16 %v563
        %v851 = vunpack.c.h.b16 %v563
        %v852 = vpack.c.b16 %v666, %v660
        %v853 = vpack.c.b16 %v667, %v661
        %v854 = vpack.c.b16 %v668, %v662
        %v855 = vpack.c.b16 %v669, %v663
        %v856 = vpack.c.b16 %v670, %v664
        %v857 = vpack.c.b16 %v671, %v665
        %v858 = vpack.c.b16 %v678, %v672
        %v859 = vpack.c.b16 %v679, %v673
        %v860 = vpack.c.b16 %v680, %v674
        %v861 = vpack.c.b16 %v681, %v675
        %v862 = vpack.c.b16 %v682, %v676
        %v863 = vpack.c.b16 %v683, %v677
        %v864 = vpack.c.b16 %v690, %v684
        %v865 = vpack.c.b16 %v691, %v685
        %v866 = vpack.c.b16 %v692, %v686
        %v867 = vpack.c.b16 %v693, %v687
        %v868 = vpack.c.b16 %v694, %v688
        %v869 = vpack.c.b16 %v695, %v689
        %v870 = vpack.c.b16 %v702, %v696
        %v871 = vpack.c.b16 %v703, %v697
        %v872 = vpack.c.b16 %v704, %v698
        %v873 = vpack.c.b16 %v705, %v699
        %v874 = vpack.c.b16 %v706, %v700
        %v875 = vpack.c.b16 %v707, %v701
        %v876 = vpack.c.b16 %v714, %v708
        %v877 = vpack.c.b16 %v715, %v709
        %v878 = vpack.c.b16 %v716, %v710
        %v879 = vpack.c.b16 %v717, %v711
        %v880 = vpack.c.b16 %v718, %v712
        %v881 = vpack.c.b16 %v719, %v713
        %v882 = vpack.c.b16 %v726, %v720
        %v883 = vpack.c.b16 %v727, %v721
        %v884 = vpack.c.b16 %v728, %v722
        %v885 = vpack.c.b16 %v729, %v723
        %v886 = vpack.c.b16 %v730, %v724
        %v887 = vpack.c.b16 %v731, %v725
        %v888 = vpack.c.b16 %v738, %v732
        %v889 = vpack.c.b16 %v739, %v733
        %v890 = vpack.c.b16 %v740, %v734
        %v891 = vpack.c.b16 %v741, %v735
        %v892 = vpack.c.b16 %v742, %v736
        %v893 = vpack.c.b16 %v743, %v737
        %v894 = vpack.c.b16 %v750, %v744
        %v895 = vpack.c.b16 %v751, %v745
        %v896 = vpack.c.b16 %v752, %v746
        %v897 = vpack.c.b16 %v753, %v747
        %v898 = vpack.c.b16 %v754, %v748
        %v899 = vpack.c.b16 %v755, %v749
        %v900 = vpack.c.b16 %v762, %v756
        %v901 = vpack.c.b16 %v763, %v757
        %v902 = vpack.c.b16 %v764, %v758
        %v903 = vpack.c.b16 %v765, %v759
        %v904 = vpack.c.b16 %v766, %v760
        %v905 = vpack.c.b16 %v767, %v761
        %v906 = vpack.c.b16 %v774, %v768
        %v907 = vpack.c.b16 %v775, %v769
        %v908 = vpack.c.b16 %v776, %v770
        %v909 = vpack.c.b16 %v777, %v771
        %v910 = vpack.c.b16 %v778, %v772
        %v911 = vpack.c.b16 %v779, %v773
        %v912 = vpack.c.b16 %v786, %v780
        %v913 = vpack.c.b16 %v787, %v781
        %v914 = vpack.c.b16 %v788, %v782
        %v915 = vpack.c.b16 %v789, %v783
        %v916 = vpack.c.b16 %v790, %v784
        %v917 = vpack.c.b16 %v791, %v785
        %v918 = vpack.c.b16 %v798, %v792
        %v919 = vpack.c.b16 %v799, %v793
        %v920 = vpack.c.b16 %v800, %v794
        %v921 = vpack.c.b16 %v801, %v795
        %v922 = vpack.c.b16 %v802, %v796
        %v923 = vpack.c.b16 %v803, %v797
        %v924 = vpack.c.b16 %v810, %v804
        %v925 = vpack.c.b16 %v811, %v805
        %v926 = vpack.c.b16 %v812, %v806
        %v927 = vpack.c.b16 %v813, %v807
        %v928 = vpack.c.b16 %v814, %v808
        %v929 = vpack.c.b16 %v815, %v809
        %v930 = vpack.c.b16 %v822, %v816
        %v931 = vpack.c.b16 %v823, %v817
        %v932 = vpack.c.b16 %v824, %v818
        %v933 = vpack.c.b16 %v825, %v819
        %v934 = vpack.c.b16 %v826, %v820
        %v935 = vpack.c.b16 %v827, %v821
        %v936 = vpack.c.b16 %v834, %v828
        %v937 = vpack.c.b16 %v835, %v829
        %v938 = vpack.c.b16 %v836, %v830
        %v939 = vpack.c.b16 %v837, %v831
        %v940 = vpack.c.b16 %v838, %v832
        %v941 = vpack.c.b16 %v839, %v833
        %v942 = vpack.c.b16 %v846, %v840
        %v943 = vpack.c.b16 %v847, %v841
        %v944 = vpack.c.b16 %v848, %v842
        %v945 = vpack.c.b16 %v849, %v843
        %v946 = vpack.c.b16 %v850, %v844
        %v947 = vpack.c.b16 %v851, %v845
        %1044 = vmatprep.subr.bf16.mxu0 %v853
        %1045 = vmatpush1.bf16.msra.mxu0 %v852
        %1046 = vmatprep.subr.bf16.mxu0 %v859
        %1047 = vmatpush1.bf16.msra.mxu0 %v858
        %1048 = vmatprep.subr.bf16.mxu0 %v865
        %1049 = vmatpush1.bf16.msra.mxu0 %v864
        %1050 = vmatprep.subr.bf16.mxu0 %v871
        %1051 = vmatpush1.bf16.msra.mxu0 %v870
        %1052 = vmatprep.subr.bf16.mxu0 %v877
        %1053 = vmatpush1.bf16.msra.mxu0 %v876
        %1054 = vmatprep.subr.bf16.mxu0 %v883
        %1055 = vmatpush1.bf16.msra.mxu0 %v882
        %1056 = vmatprep.subr.bf16.mxu0 %v889
        %1057 = vmatpush1.bf16.msra.mxu0 %v888
        %1058 = vmatprep.subr.bf16.mxu0 %v895
        %1059 = vmatpush1.bf16.msra.mxu0 %v894
        %1060 = vmatprep.subr.bf16.mxu0 %v901
        %1061 = vmatpush1.bf16.msra.mxu0 %v900
        %1062 = vmatprep.subr.bf16.mxu0 %v907
        %1063 = vmatpush1.bf16.msra.mxu0 %v906
        %1064 = vmatprep.subr.bf16.mxu0 %v913
        %1065 = vmatpush1.bf16.msra.mxu0 %v912
        %1066 = vmatprep.subr.bf16.mxu0 %v919
        %1067 = vmatpush1.bf16.msra.mxu0 %v918
        %1068 = vmatprep.subr.bf16.mxu0 %v925
        %1069 = vmatpush1.bf16.msra.mxu0 %v924
        %1070 = vmatprep.subr.bf16.mxu0 %v931
        %1071 = vmatpush1.bf16.msra.mxu0 %v930
        %1072 = vmatprep.subr.bf16.mxu0 %v937
        %1073 = vmatpush1.bf16.msra.mxu0 %v936
        %1074 = vmatprep.subr.bf16.mxu0 %v943
        %1075 = vmatpush1.bf16.msra.mxu0 %v942
        %1076 = vmatprep.mubr.bf16.mxu0 %v465
        %1077 = vmatmul.mubr.bf16.gmra.mrb[0].mxu0 %v464
        %v1078 = vpop.f32.mrb[0].mxu0
        %v1079 = vadd.f32 0.0, %v1078
        %v1080 = vpop.f32.mrb[0].mxu0
        %v1081 = vadd.f32 0.0, %v1080
        %v1082 = vpop.f32.mrb[0].mxu0
        %v1083 = vadd.f32 0.0, %v1082
        %v1084 = vpop.f32.mrb[0].mxu0
        %v1085 = vadd.f32 0.0, %v1084
        %1086 = vmatprep.mubr.bf16.mxu0 %v467
        %1087 = vmatmul.mubr.bf16.gmra.mrb[0].mxu0 %v466
        %v1088 = vpop.f32.mrb[0].mxu0
        %v1089 = vadd.f32 0.0, %v1088
        %v1090 = vpop.f32.mrb[0].mxu0
        %v1091 = vadd.f32 0.0, %v1090
        %v1092 = vpop.f32.mrb[0].mxu0
        %v1093 = vadd.f32 0.0, %v1092
        %v1094 = vpop.f32.mrb[0].mxu0
        %v1095 = vadd.f32 0.0, %v1094
        %1096 = vdwg.mxu0
        %1097 = vmatprep.subr.bf16.mxu0 %v855
        %1098 = vmatpush1.bf16.msra.mxu0 %v854
        %1099 = vmatprep.subr.bf16.mxu0 %v861
        %1100 = vmatpush1.bf16.msra.mxu0 %v860
        %1101 = vmatprep.subr.bf16.mxu0 %v867
        %1102 = vmatpush1.bf16.msra.mxu0 %v866
        %1103 = vmatprep.subr.bf16.mxu0 %v873
        %1104 = vmatpush1.bf16.msra.mxu0 %v872
        %1105 = vmatprep.subr.bf16.mxu0 %v879
        %1106 = vmatpush1.bf16.msra.mxu0 %v878
        %1107 = vmatprep.subr.bf16.mxu0 %v885
        %1108 = vmatpush1.bf16.msra.mxu0 %v884
        %1109 = vmatprep.subr.bf16.mxu0 %v891
        %1110 = vmatpush1.bf16.msra.mxu0 %v890
        %1111 = vmatprep.subr.bf16.mxu0 %v897
        %1112 = vmatpush1.bf16.msra.mxu0 %v896
        %1113 = vmatprep.subr.bf16.mxu0 %v903
        %1114 = vmatpush1.bf16.msra.mxu0 %v902
        %1115 = vmatprep.subr.bf16.mxu0 %v909
        %1116 = vmatpush1.bf16.msra.mxu0 %v908
        %1117 = vmatprep.subr.bf16.mxu0 %v915
        %1118 = vmatpush1.bf16.msra.mxu0 %v914
        %1119 = vmatprep.subr.bf16.mxu0 %v921
        %1120 = vmatpush1.bf16.msra.mxu0 %v920
        %1121 = vmatprep.subr.bf16.mxu0 %v927
        %1122 = vmatpush1.bf16.msra.mxu0 %v926
        %1123 = vmatprep.subr.bf16.mxu0 %v933
        %1124 = vmatpush1.bf16.msra.mxu0 %v932
        %1125 = vmatprep.subr.bf16.mxu0 %v939
        %1126 = vmatpush1.bf16.msra.mxu0 %v938
        %1127 = vmatprep.subr.bf16.mxu0 %v945
        %1128 = vmatpush1.bf16.msra.mxu0 %v944
        %1129 = vmatprep.mubr.bf16.mxu0 %v465
        %1130 = vmatmul.mubr.bf16.gmra.mrb[0].mxu0 %v464
        %v1131 = vpop.f32.mrb[0].mxu0
        %v1132 = vadd.f32 0.0, %v1131
        %v1133 = vpop.f32.mrb[0].mxu0
        %v1134 = vadd.f32 0.0, %v1133
        %v1135 = vpop.f32.mrb[0].mxu0
        %v1136 = vadd.f32 0.0, %v1135
        %v1137 = vpop.f32.mrb[0].mxu0
        %v1138 = vadd.f32 0.0, %v1137
        %1139 = vmatprep.mubr.bf16.mxu0 %v467
        %1140 = vmatmul.mubr.bf16.gmra.mrb[0].mxu0 %v466
        %v1141 = vpop.f32.mrb[0].mxu0
        %v1142 = vadd.f32 0.0, %v1141
        %v1143 = vpop.f32.mrb[0].mxu0
        %v1144 = vadd.f32 0.0, %v1143
        %v1145 = vpop.f32.mrb[0].mxu0
        %v1146 = vadd.f32 0.0, %v1145
        %v1147 = vpop.f32.mrb[0].mxu0
        %v1148 = vadd.f32 0.0, %v1147
        %1149 = vdwg.mxu0
        %1150 = vmatprep.subr.bf16.mxu0 %v857
        %1151 = vmatpush1.bf16.msra.mxu0 %v856
        %1152 = vmatprep.subr.bf16.mxu0 %v863
        %1153 = vmatpush1.bf16.msra.mxu0 %v862
        %1154 = vmatprep.subr.bf16.mxu0 %v869
        %1155 = vmatpush1.bf16.msra.mxu0 %v868
        %1156 = vmatprep.subr.bf16.mxu0 %v875
        %1157 = vmatpush1.bf16.msra.mxu0 %v874
        %1158 = vmatprep.subr.bf16.mxu0 %v881
        %1159 = vmatpush1.bf16.msra.mxu0 %v880
        %1160 = vmatprep.subr.bf16.mxu0 %v887
        %1161 = vmatpush1.bf16.msra.mxu0 %v886
        %1162 = vmatprep.subr.bf16.mxu0 %v893
        %1163 = vmatpush1.bf16.msra.mxu0 %v892
        %1164 = vmatprep.subr.bf16.mxu0 %v899
        %1165 = vmatpush1.bf16.msra.mxu0 %v898
        %1166 = vmatprep.subr.bf16.mxu0 %v905
        %1167 = vmatpush1.bf16.msra.mxu0 %v904
        %1168 = vmatprep.subr.bf16.mxu0 %v911
        %1169 = vmatpush1.bf16.msra.mxu0 %v910
        %1170 = vmatprep.subr.bf16.mxu0 %v917
        %1171 = vmatpush1.bf16.msra.mxu0 %v916
        %1172 = vmatprep.subr.bf16.mxu0 %v923
        %1173 = vmatpush1.bf16.msra.mxu0 %v922
        %1174 = vmatprep.subr.bf16.mxu0 %v929
        %1175 = vmatpush1.bf16.msra.mxu0 %v928
        %1176 = vmatprep.subr.bf16.mxu0 %v935
        %1177 = vmatpush1.bf16.msra.mxu0 %v934
        %1178 = vmatprep.subr.bf16.mxu0 %v941
        %1179 = vmatpush1.bf16.msra.mxu0 %v940
        %1180 = vmatprep.subr.bf16.mxu0 %v947
        %1181 = vmatpush1.bf16.msra.mxu0 %v946
        %1182 = vmatprep.mubr.bf16.mxu0 %v465
        %1183 = vmatmul.mubr.bf16.gmra.mrb[0].mxu0 %v464
        %v1184 = vpop.f32.mrb[0].mxu0
        %v1185 = vadd.f32 0.0, %v1184
        %v1186 = vpop.f32.mrb[0].mxu0
        %v1187 = vadd.f32 0.0, %v1186
        %v1188 = vpop.f32.mrb[0].mxu0
        %v1189 = vadd.f32 0.0, %v1188
        %v1190 = vpop.f32.mrb[0].mxu0
        %v1191 = vadd.f32 0.0, %v1190
        %1192 = vmatprep.mubr.bf16.mxu0 %v467
        %1193 = vmatmul.mubr.bf16.gmra.mrb[0].mxu0 %v466
        %v1194 = vpop.f32.mrb[0].mxu0
        %v1195 = vadd.f32 0.0, %v1194
        %v1196 = vpop.f32.mrb[0].mxu0
        %v1197 = vadd.f32 0.0, %v1196
        %v1198 = vpop.f32.mrb[0].mxu0
        %v1199 = vadd.f32 0.0, %v1198
        %v1200 = vpop.f32.mrb[0].mxu0
        %v1201 = vadd.f32 0.0, %v1200
        %1202 = vdwg.mxu0
        %v1203 = vld [vmem:[#allocation7] sm:$0xff]
        %v1204 = vld [vmem:[#allocation7 + $0x8] sm:$0xff]
        %v1205 = vld [vmem:[#allocation7 + $0x10] sm:$0xff]
        %v1206 = vld [vmem:[#allocation7 + $0x18] sm:$0xff]
        %v1207 = vld [vmem:[#allocation8] sm:$0xff]
        %v1208 = vld [vmem:[#allocation8 + $0x8] sm:$0xff]
        %v1209 = vld [vmem:[#allocation8 + $0x10] sm:$0xff]
        %v1210 = vld [vmem:[#allocation8 + $0x18] sm:$0xff]
        %v1211 = vld [vmem:[#allocation10] sm:$0x1]
        %v1212 = vmul.f32 %v1079, %v1203
        %v1213 = vmul.f32 %v1083, %v1204
        %v1214 = vmul.f32 %v1089, %v1205
        %v1215 = vmul.f32 %v1093, %v1206
        %1216 = vrot.lane.b32.xlu0 %v1079, 64
        %v1217 = vpop.permute.xlu0 %1216
        %1218 = vrot.lane.b32.xlu0 %v1083, 64
        %v1219 = vpop.permute.xlu0 %1218
        %1220 = vrot.lane.b32.xlu0 %v1089, 64
        %v1221 = vpop.permute.xlu0 %1220
        %1222 = vrot.lane.b32.xlu0 %v1093, 64
        %v1223 = vpop.permute.xlu0 %1222
        %v1224 = vmul.f32 %v1217, %v1207
        %v1225 = vmul.f32 %v1219, %v1208
        %v1226 = vmul.f32 %v1221, %v1209
        %v1227 = vmul.f32 %v1223, %v1210
        %v1228 = vadd.f32 %v1212, %v1224
        %v1229 = vadd.f32 %v1213, %v1225
        %v1230 = vadd.f32 %v1214, %v1226
        %v1231 = vadd.f32 %v1215, %v1227
        %v1232 = vmul.f32 %v1228, %v1228
        %v1233 = vmul.f32 %v1229, %v1229
        %v1234 = vmul.f32 %v1230, %v1230
        %v1235 = vmul.f32 %v1231, %v1231
        %1236 = vadd.xlane.f32.xlu0 %v1232
        %v1237 = vpop.xlane.xlu0 %1236
        %1238 = vadd.xlane.f32.xlu0 %v1233
        %v1239 = vpop.xlane.xlu0 %1238
        %1240 = vadd.xlane.f32.xlu0 %v1234
        %v1241 = vpop.xlane.xlu0 %1240
        %1242 = vadd.xlane.f32.xlu0 %v1235
        %v1243 = vpop.xlane.xlu0 %1242
        %v1244 = vrsqrt.pop %v1237
        %v1245 = vmul.f32 %v1237, %v1244
        %vm1246 = vcmp.eq.f32.partialorder %v1237, inf
        %v1247 = vsel %vm1246, %v1237, %v1245
        %vm1248 = vcmp.eq.f32.partialorder %v1237, 0.0
        %v1249 = vand.u32 %v1237, 2147483648
        %v1250 = vsel %vm1248, %v1249, %v1247
        %v1251 = vrsqrt.pop %v1239
        %v1252 = vmul.f32 %v1239, %v1251
        %vm1253 = vcmp.eq.f32.partialorder %v1239, inf
        %v1254 = vsel %vm1253, %v1239, %v1252
        %vm1255 = vcmp.eq.f32.partialorder %v1239, 0.0
        %v1256 = vand.u32 %v1239, 2147483648
        %v1257 = vsel %vm1255, %v1256, %v1254
        %v1258 = vrsqrt.pop %v1241
        %v1259 = vmul.f32 %v1241, %v1258
        %vm1260 = vcmp.eq.f32.partialorder %v1241, inf
        %v1261 = vsel %vm1260, %v1241, %v1259
        %vm1262 = vcmp.eq.f32.partialorder %v1241, 0.0
        %v1263 = vand.u32 %v1241, 2147483648
        %v1264 = vsel %vm1262, %v1263, %v1261
        %v1265 = vrsqrt.pop %v1243
        %v1266 = vmul.f32 %v1243, %v1265
        %vm1267 = vcmp.eq.f32.partialorder %v1243, inf
        %v1268 = vsel %vm1267, %v1243, %v1266
        %vm1269 = vcmp.eq.f32.partialorder %v1243, 0.0
        %v1270 = vand.u32 %v1243, 2147483648
        %v1271 = vsel %vm1269, %v1270, %v1268
        %v1272 = vmax.f32 %v1250, 1e-05
        %v1273 = vmax.f32 %v1257, 1e-05
        %v1274 = vmax.f32 %v1264, 1e-05
        %v1275 = vmax.f32 %v1271, 1e-05
        %v1276 = vrcp.pop %v1272
        %v1277 = vrcp.pop %v1273
        %v1278 = vrcp.pop %v1274
        %v1279 = vrcp.pop %v1275
        %v1280 = vmul.f32 %v1228, %v1276
        %v1281 = vmul.f32 %v1229, %v1277
        %v1282 = vmul.f32 %v1230, %v1278
        %v1283 = vmul.f32 %v1231, %v1279
        %v1285 = vlaneseq
        %v1286 = vshrl.u32 %v1285, 7
        %v1287 = vsub.s32 0, %v1286
        %v1288 = vrot.slane %v1211, %v1287
        %v1290 = vmul.f32 %v1288, %v1280
        %v1291 = vmul.f32 %v1288, %v1281
        %v1292 = vmul.f32 %v1288, %v1282
        %v1293 = vmul.f32 %v1288, %v1283
        %v1294 = vpack.c.bf16 %v1291, %v1290
        %v1295 = vpack.c.bf16 %v1293, %v1292
        %v1298 = vunpack.c.l.b16 %v1294
        %v1299 = vunpack.c.h.b16 %v1294
        %v1300 = vunpack.c.l.b16 %v1295
        %v1301 = vunpack.c.h.b16 %v1295
        %v1302 = vpack.c.b16 %v1298, %v1298
        %v1303 = vpack.c.b16 %v1299, %v1299
        %v1304 = vpack.c.b16 %v1300, %v1300
        %v1305 = vpack.c.b16 %v1301, %v1301
        %1310 = vst [vmem:[%s435] sm:$0xf] %v1302
        %1311 = vst [vmem:[%s435 + $0x4] sm:$0xf] %v1303
        %1312 = vst [vmem:[%s435 + $0x8] sm:$0xf] %v1304
        %1313 = vst [vmem:[%s435 + $0xc] sm:$0xf] %v1305
        %v1314 = vld [vmem:[#allocation11] sm:$0x1]
        %v1315 = vmul.f32 %v1132, %v1203
        %v1316 = vmul.f32 %v1136, %v1204
        %v1317 = vmul.f32 %v1142, %v1205
        %v1318 = vmul.f32 %v1146, %v1206
        %1319 = vrot.lane.b32.xlu0 %v1132, 64
        %v1320 = vpop.permute.xlu0 %1319
        %1321 = vrot.lane.b32.xlu0 %v1136, 64
        %v1322 = vpop.permute.xlu0 %1321
        %1323 = vrot.lane.b32.xlu0 %v1142, 64
        %v1324 = vpop.permute.xlu0 %1323
        %1325 = vrot.lane.b32.xlu0 %v1146, 64
        %v1326 = vpop.permute.xlu0 %1325
        %v1327 = vmul.f32 %v1320, %v1207
        %v1328 = vmul.f32 %v1322, %v1208
        %v1329 = vmul.f32 %v1324, %v1209
        %v1330 = vmul.f32 %v1326, %v1210
        %v1331 = vadd.f32 %v1315, %v1327
        %v1332 = vadd.f32 %v1316, %v1328
        %v1333 = vadd.f32 %v1317, %v1329
        %v1334 = vadd.f32 %v1318, %v1330
        %v1335 = vmul.f32 %v1331, %v1331
        %v1336 = vmul.f32 %v1332, %v1332
        %v1337 = vmul.f32 %v1333, %v1333
        %v1338 = vmul.f32 %v1334, %v1334
        %1339 = vadd.xlane.f32.xlu0 %v1335
        %v1340 = vpop.xlane.xlu0 %1339
        %1341 = vadd.xlane.f32.xlu0 %v1336
        %v1342 = vpop.xlane.xlu0 %1341
        %1343 = vadd.xlane.f32.xlu0 %v1337
        %v1344 = vpop.xlane.xlu0 %1343
        %1345 = vadd.xlane.f32.xlu0 %v1338
        %v1346 = vpop.xlane.xlu0 %1345
        %v1347 = vrsqrt.pop %v1340
        %v1348 = vmul.f32 %v1340, %v1347
        %vm1349 = vcmp.eq.f32.partialorder %v1340, inf
        %v1350 = vsel %vm1349, %v1340, %v1348
        %vm1351 = vcmp.eq.f32.partialorder %v1340, 0.0
        %v1352 = vand.u32 %v1340, 2147483648
        %v1353 = vsel %vm1351, %v1352, %v1350
        %v1354 = vrsqrt.pop %v1342
        %v1355 = vmul.f32 %v1342, %v1354
        %vm1356 = vcmp.eq.f32.partialorder %v1342, inf
        %v1357 = vsel %vm1356, %v1342, %v1355
        %vm1358 = vcmp.eq.f32.partialorder %v1342, 0.0
        %v1359 = vand.u32 %v1342, 2147483648
        %v1360 = vsel %vm1358, %v1359, %v1357
        %v1361 = vrsqrt.pop %v1344
        %v1362 = vmul.f32 %v1344, %v1361
        %vm1363 = vcmp.eq.f32.partialorder %v1344, inf
        %v1364 = vsel %vm1363, %v1344, %v1362
        %vm1365 = vcmp.eq.f32.partialorder %v1344, 0.0
        %v1366 = vand.u32 %v1344, 2147483648
        %v1367 = vsel %vm1365, %v1366, %v1364
        %v1368 = vrsqrt.pop %v1346
        %v1369 = vmul.f32 %v1346, %v1368
        %vm1370 = vcmp.eq.f32.partialorder %v1346, inf
        %v1371 = vsel %vm1370, %v1346, %v1369
        %vm1372 = vcmp.eq.f32.partialorder %v1346, 0.0
        %v1373 = vand.u32 %v1346, 2147483648
        %v1374 = vsel %vm1372, %v1373, %v1371
        %v1375 = vmax.f32 %v1353, 1e-05
        %v1376 = vmax.f32 %v1360, 1e-05
        %v1377 = vmax.f32 %v1367, 1e-05
        %v1378 = vmax.f32 %v1374, 1e-05
        %v1379 = vrcp.pop %v1375
        %v1380 = vrcp.pop %v1376
        %v1381 = vrcp.pop %v1377
        %v1382 = vrcp.pop %v1378
        %v1383 = vmul.f32 %v1331, %v1379
        %v1384 = vmul.f32 %v1332, %v1380
        %v1385 = vmul.f32 %v1333, %v1381
        %v1386 = vmul.f32 %v1334, %v1382
        %v1388 = vlaneseq
        %v1389 = vshrl.u32 %v1388, 7
        %v1390 = vsub.s32 0, %v1389
        %v1391 = vrot.slane %v1314, %v1390
        %v1393 = vmul.f32 %v1391, %v1383
        %v1394 = vmul.f32 %v1391, %v1384
        %v1395 = vmul.f32 %v1391, %v1385
        %v1396 = vmul.f32 %v1391, %v1386
        %v1397 = vpack.c.bf16 %v1394, %v1393
        %v1398 = vpack.c.bf16 %v1396, %v1395
        %v1401 = vunpack.c.l.b16 %v1397
        %v1402 = vunpack.c.h.b16 %v1397
        %v1403 = vunpack.c.l.b16 %v1398
        %v1404 = vunpack.c.h.b16 %v1398
        %v1405 = vpack.c.b16 %v1401, %v1401
        %v1406 = vpack.c.b16 %v1402, %v1402
        %v1407 = vpack.c.b16 %v1403, %v1403
        %v1408 = vpack.c.b16 %v1404, %v1404
        %1413 = vst [vmem:[%s442] sm:$0xf] %v1405
        %1414 = vst [vmem:[%s442 + $0x4] sm:$0xf] %v1406
        %1415 = vst [vmem:[%s442 + $0x8] sm:$0xf] %v1407
        %1416 = vst [vmem:[%s442 + $0xc] sm:$0xf] %v1408
        %v1417 = vpack.c.bf16 %v1189, %v1185
        %v1418 = vpack.c.bf16 %v1199, %v1195
        %v1421 = vunpack.c.l.b16 %v1417
        %v1422 = vunpack.c.h.b16 %v1417
        %v1423 = vunpack.c.l.b16 %v1418
        %v1424 = vunpack.c.h.b16 %v1418
        %v1425 = vpack.c.b16 %v1421, %v1421
        %v1426 = vpack.c.b16 %v1422, %v1422
        %v1427 = vpack.c.b16 %v1423, %v1423
        %v1428 = vpack.c.b16 %v1424, %v1424
        %1433 = vst [vmem:[%s449] sm:$0xf] %v1425
        %1434 = vst [vmem:[%s449 + $0x4] sm:$0xf] %v1426
        %1435 = vst [vmem:[%s449 + $0x8] sm:$0xf] %v1427
        %1436 = vst [vmem:[%s449 + $0xc] sm:$0xf] %v1428
        %v1437 = vld [vmem:[#allocation10 + $0x1] sm:$0x1]
        %v1438 = vmul.f32 %v1081, %v1203
        %v1439 = vmul.f32 %v1085, %v1204
        %v1440 = vmul.f32 %v1091, %v1205
        %v1441 = vmul.f32 %v1095, %v1206
        %1442 = vrot.lane.b32.xlu0 %v1081, 64
        %v1443 = vpop.permute.xlu0 %1442
        %1444 = vrot.lane.b32.xlu0 %v1085, 64
        %v1445 = vpop.permute.xlu0 %1444
        %1446 = vrot.lane.b32.xlu0 %v1091, 64
        %v1447 = vpop.permute.xlu0 %1446
        %1448 = vrot.lane.b32.xlu0 %v1095, 64
        %v1449 = vpop.permute.xlu0 %1448
        %v1450 = vmul.f32 %v1443, %v1207
        %v1451 = vmul.f32 %v1445, %v1208
        %v1452 = vmul.f32 %v1447, %v1209
        %v1453 = vmul.f32 %v1449, %v1210
        %v1454 = vadd.f32 %v1438, %v1450
        %v1455 = vadd.f32 %v1439, %v1451
        %v1456 = vadd.f32 %v1440, %v1452
        %v1457 = vadd.f32 %v1441, %v1453
        %v1458 = vmul.f32 %v1454, %v1454
        %v1459 = vmul.f32 %v1455, %v1455
        %v1460 = vmul.f32 %v1456, %v1456
        %v1461 = vmul.f32 %v1457, %v1457
        %1462 = vadd.xlane.f32.xlu0 %v1458
        %v1463 = vpop.xlane.xlu0 %1462
        %1464 = vadd.xlane.f32.xlu0 %v1459
        %v1465 = vpop.xlane.xlu0 %1464
        %1466 = vadd.xlane.f32.xlu0 %v1460
        %v1467 = vpop.xlane.xlu0 %1466
        %1468 = vadd.xlane.f32.xlu0 %v1461
        %v1469 = vpop.xlane.xlu0 %1468
        %v1470 = vrsqrt.pop %v1463
        %v1471 = vmul.f32 %v1463, %v1470
        %vm1472 = vcmp.eq.f32.partialorder %v1463, inf
        %v1473 = vsel %vm1472, %v1463, %v1471
        %vm1474 = vcmp.eq.f32.partialorder %v1463, 0.0
        %v1475 = vand.u32 %v1463, 2147483648
        %v1476 = vsel %vm1474, %v1475, %v1473
        %v1477 = vrsqrt.pop %v1465
        %v1478 = vmul.f32 %v1465, %v1477
        %vm1479 = vcmp.eq.f32.partialorder %v1465, inf
        %v1480 = vsel %vm1479, %v1465, %v1478
        %vm1481 = vcmp.eq.f32.partialorder %v1465, 0.0
        %v1482 = vand.u32 %v1465, 2147483648
        %v1483 = vsel %vm1481, %v1482, %v1480
        %v1484 = vrsqrt.pop %v1467
        %v1485 = vmul.f32 %v1467, %v1484
        %vm1486 = vcmp.eq.f32.partialorder %v1467, inf
        %v1487 = vsel %vm1486, %v1467, %v1485
        %vm1488 = vcmp.eq.f32.partialorder %v1467, 0.0
        %v1489 = vand.u32 %v1467, 2147483648
        %v1490 = vsel %vm1488, %v1489, %v1487
        %v1491 = vrsqrt.pop %v1469
        %v1492 = vmul.f32 %v1469, %v1491
        %vm1493 = vcmp.eq.f32.partialorder %v1469, inf
        %v1494 = vsel %vm1493, %v1469, %v1492
        %vm1495 = vcmp.eq.f32.partialorder %v1469, 0.0
        %v1496 = vand.u32 %v1469, 2147483648
        %v1497 = vsel %vm1495, %v1496, %v1494
        %v1498 = vmax.f32 %v1476, 1e-05
        %v1499 = vmax.f32 %v1483, 1e-05
        %v1500 = vmax.f32 %v1490, 1e-05
        %v1501 = vmax.f32 %v1497, 1e-05
        %v1502 = vrcp.pop %v1498
        %v1503 = vrcp.pop %v1499
        %v1504 = vrcp.pop %v1500
        %v1505 = vrcp.pop %v1501
        %v1506 = vmul.f32 %v1454, %v1502
        %v1507 = vmul.f32 %v1455, %v1503
        %v1508 = vmul.f32 %v1456, %v1504
        %v1509 = vmul.f32 %v1457, %v1505
        %v1511 = vlaneseq
        %v1512 = vshrl.u32 %v1511, 7
        %v1513 = vsub.s32 0, %v1512
        %v1514 = vrot.slane %v1437, %v1513
        %v1516 = vmul.f32 %v1514, %v1506
        %v1517 = vmul.f32 %v1514, %v1507
        %v1518 = vmul.f32 %v1514, %v1508
        %v1519 = vmul.f32 %v1514, %v1509
        %v1520 = vpack.c.bf16 %v1517, %v1516
        %v1521 = vpack.c.bf16 %v1519, %v1518
        %v1524 = vunpack.c.l.b16 %v1520
        %v1525 = vunpack.c.h.b16 %v1520
        %v1526 = vunpack.c.l.b16 %v1521
        %v1527 = vunpack.c.h.b16 %v1521
        %v1528 = vpack.c.b16 %v1524, %v1524
        %v1529 = vpack.c.b16 %v1525, %v1525
        %v1530 = vpack.c.b16 %v1526, %v1526
        %v1531 = vpack.c.b16 %v1527, %v1527
        %s1536 = scalar_lea.vmem %s435, 16 [#allocation13]
        %1537 = vst [vmem:[%s1536] sm:$0xf] %v1528
        %1538 = vst [vmem:[%s1536 + $0x4] sm:$0xf] %v1529
        %1539 = vst [vmem:[%s1536 + $0x8] sm:$0xf] %v1530
        %1540 = vst [vmem:[%s1536 + $0xc] sm:$0xf] %v1531
        %v1541 = vld [vmem:[#allocation11 + $0x1] sm:$0x1]
        %v1542 = vmul.f32 %v1134, %v1203
        %v1543 = vmul.f32 %v1138, %v1204
        %v1544 = vmul.f32 %v1144, %v1205
        %v1545 = vmul.f32 %v1148, %v1206
        %1546 = vrot.lane.b32.xlu0 %v1134, 64
        %v1547 = vpop.permute.xlu0 %1546
        %1548 = vrot.lane.b32.xlu0 %v1138, 64
        %v1549 = vpop.permute.xlu0 %1548
        %1550 = vrot.lane.b32.xlu0 %v1144, 64
        %v1551 = vpop.permute.xlu0 %1550
        %1552 = vrot.lane.b32.xlu0 %v1148, 64
        %v1553 = vpop.permute.xlu0 %1552
        %v1554 = vmul.f32 %v1547, %v1207
        %v1555 = vmul.f32 %v1549, %v1208
        %v1556 = vmul.f32 %v1551, %v1209
        %v1557 = vmul.f32 %v1553, %v1210
        %v1558 = vadd.f32 %v1542, %v1554
        %v1559 = vadd.f32 %v1543, %v1555
        %v1560 = vadd.f32 %v1544, %v1556
        %v1561 = vadd.f32 %v1545, %v1557
        %v1562 = vmul.f32 %v1558, %v1558
        %v1563 = vmul.f32 %v1559, %v1559
        %v1564 = vmul.f32 %v1560, %v1560
        %v1565 = vmul.f32 %v1561, %v1561
        %1566 = vadd.xlane.f32.xlu0 %v1562
        %v1567 = vpop.xlane.xlu0 %1566
        %1568 = vadd.xlane.f32.xlu0 %v1563
        %v1569 = vpop.xlane.xlu0 %1568
        %1570 = vadd.xlane.f32.xlu0 %v1564
        %v1571 = vpop.xlane.xlu0 %1570
        %1572 = vadd.xlane.f32.xlu0 %v1565
        %v1573 = vpop.xlane.xlu0 %1572
        %v1574 = vrsqrt.pop %v1567
        %v1575 = vmul.f32 %v1567, %v1574
        %vm1576 = vcmp.eq.f32.partialorder %v1567, inf
        %v1577 = vsel %vm1576, %v1567, %v1575
        %vm1578 = vcmp.eq.f32.partialorder %v1567, 0.0
        %v1579 = vand.u32 %v1567, 2147483648
        %v1580 = vsel %vm1578, %v1579, %v1577
        %v1581 = vrsqrt.pop %v1569
        %v1582 = vmul.f32 %v1569, %v1581
        %vm1583 = vcmp.eq.f32.partialorder %v1569, inf
        %v1584 = vsel %vm1583, %v1569, %v1582
        %vm1585 = vcmp.eq.f32.partialorder %v1569, 0.0
        %v1586 = vand.u32 %v1569, 2147483648
        %v1587 = vsel %vm1585, %v1586, %v1584
        %v1588 = vrsqrt.pop %v1571
        %v1589 = vmul.f32 %v1571, %v1588
        %vm1590 = vcmp.eq.f32.partialorder %v1571, inf
        %v1591 = vsel %vm1590, %v1571, %v1589
        %vm1592 = vcmp.eq.f32.partialorder %v1571, 0.0
        %v1593 = vand.u32 %v1571, 2147483648
        %v1594 = vsel %vm1592, %v1593, %v1591
        %v1595 = vrsqrt.pop %v1573
        %v1596 = vmul.f32 %v1573, %v1595
        %vm1597 = vcmp.eq.f32.partialorder %v1573, inf
        %v1598 = vsel %vm1597, %v1573, %v1596
        %vm1599 = vcmp.eq.f32.partialorder %v1573, 0.0
        %v1600 = vand.u32 %v1573, 2147483648
        %v1601 = vsel %vm1599, %v1600, %v1598
        %v1602 = vmax.f32 %v1580, 1e-05
        %v1603 = vmax.f32 %v1587, 1e-05
        %v1604 = vmax.f32 %v1594, 1e-05
        %v1605 = vmax.f32 %v1601, 1e-05
        %v1606 = vrcp.pop %v1602
        %v1607 = vrcp.pop %v1603
        %v1608 = vrcp.pop %v1604
        %v1609 = vrcp.pop %v1605
        %v1610 = vmul.f32 %v1558, %v1606
        %v1611 = vmul.f32 %v1559, %v1607
        %v1612 = vmul.f32 %v1560, %v1608
        %v1613 = vmul.f32 %v1561, %v1609
        %v1615 = vlaneseq
        %v1616 = vshrl.u32 %v1615, 7
        %v1617 = vsub.s32 0, %v1616
        %v1618 = vrot.slane %v1541, %v1617
        %v1620 = vmul.f32 %v1618, %v1610
        %v1621 = vmul.f32 %v1618, %v1611
        %v1622 = vmul.f32 %v1618, %v1612
        %v1623 = vmul.f32 %v1618, %v1613
        %v1624 = vpack.c.bf16 %v1621, %v1620
        %v1625 = vpack.c.bf16 %v1623, %v1622
        %v1628 = vunpack.c.l.b16 %v1624
        %v1629 = vunpack.c.h.b16 %v1624
        %v1630 = vunpack.c.l.b16 %v1625
        %v1631 = vunpack.c.h.b16 %v1625
        %v1632 = vpack.c.b16 %v1628, %v1628
        %v1633 = vpack.c.b16 %v1629, %v1629
        %v1634 = vpack.c.b16 %v1630, %v1630
        %v1635 = vpack.c.b16 %v1631, %v1631
        %s1640 = scalar_lea.vmem %s442, 16 [#allocation14]
        %1641 = vst [vmem:[%s1640] sm:$0xf] %v1632
        %1642 = vst [vmem:[%s1640 + $0x4] sm:$0xf] %v1633
        %1643 = vst [vmem:[%s1640 + $0x8] sm:$0xf] %v1634
        %1644 = vst [vmem:[%s1640 + $0xc] sm:$0xf] %v1635
        %v1645 = vpack.c.bf16 %v1191, %v1187
        %v1646 = vpack.c.bf16 %v1201, %v1197
        %v1649 = vunpack.c.l.b16 %v1645
        %v1650 = vunpack.c.h.b16 %v1645
        %v1651 = vunpack.c.l.b16 %v1646
        %v1652 = vunpack.c.h.b16 %v1646
        %v1653 = vpack.c.b16 %v1649, %v1649
        %v1654 = vpack.c.b16 %v1650, %v1650
        %v1655 = vpack.c.b16 %v1651, %v1651
        %v1656 = vpack.c.b16 %v1652, %v1652
        %s1661 = scalar_lea.vmem %s449, 16 [#allocation16]
        %1662 = vst [vmem:[%s1661] sm:$0xf] %v1653
        %1663 = vst [vmem:[%s1661 + $0x4] sm:$0xf] %v1654
        %1664 = vst [vmem:[%s1661 + $0x8] sm:$0xf] %v1655
        %1665 = vst [vmem:[%s1661 + $0xc] sm:$0xf] %v1656
        %s1666 = sand.u32 %s197, 1
        %s1667 = scalar_lea.sflag [#allocation4], %s1666
        %s1668 = sand.u32 %s197, 1
        %s1669 = smul.addr %s1668, 32
        %s1670 = scalar_lea.vmem [#allocation13], %s1669
        %s1671 = sand.u32 %s32, 1
        %s1672 = scalar_lea.sflag [#allocation15], %s1671
        %s1673 = sand.u32 %s225, 1
        %s1674 = smul.addr %s1673, 32
        %s1675 = scalar_lea.vmem [#allocation14], %s1674
        %s1676 = sand.u32 %s32, 1
        %s1677 = scalar_lea.sflag [#allocation15], %s1676
        %s1678 = sand.u32 %s253, 1
        %s1679 = smul.addr %s1678, 32
        %s1680 = scalar_lea.vmem [#allocation16], %s1679
        // Predicated region
        $region69: #{tpu_custom_call.1} parent=43 // pred_check
          %p1681 = pneg %p207
        $region70: #{tpu_custom_call.1} parent=43 // pred_check_branch
          %1683 = sbr.rel (%p1681) target = $region72
        $region71: #{tpu_custom_call.1} parent=43 // pred_region
          %s1684 = smul.u32 4, %s37
          %s1686 = ssub.s32 512, 512
          %1687 = vsyncadd %s1667, %s1686
          %s1688 = smul.addr %s36, 8
          %s1689 = sadd.s32 %s1684, %s1688
          %s1690 = smul.addr %s1689, 64
          %s1691 = scalar_lea.hbm %s6, %s1690
          %s1692 = sshll.u32 %s1670, 4
          %s1693 = int_to_ptr.vmem [resolvable:$true] %s1692
          %1698 = dma.vmem_to_hbm [thread:$0]  %s1693, 512, %s1691, %s1667, 64, 64, 4
        $region72: #{tpu_custom_call.1} parent=43 // pred_fallthru
          _
        // Predicated region
        $region73: #{tpu_custom_call.1} parent=43 // pred_check
          %p1699 = pneg %p235
        $region74: #{tpu_custom_call.1} parent=43 // pred_check_branch
          %1701 = sbr.rel (%p1699) target = $region76
        $region75: #{tpu_custom_call.1} parent=43 // pred_region
          %s1702 = smul.u32 4, %s37
          %s1704 = ssub.s32 512, 512
          %1705 = vsyncadd %s1672, %s1704
          %s1706 = smul.addr %s36, 8
          %s1707 = sadd.s32 %s1702, %s1706
          %s1708 = smul.addr %s1707, 64
          %s1709 = scalar_lea.hbm %s7, %s1708
          %s1710 = sshll.u32 %s1675, 4
          %s1711 = int_to_ptr.vmem [resolvable:$true] %s1710
          %1716 = dma.vmem_to_hbm [thread:$0]  %s1711, 512, %s1709, %s1672, 64, 64, 4
        $region76: #{tpu_custom_call.1} parent=43 // pred_fallthru
          _
        // Predicated region
        $region77: #{tpu_custom_call.1} parent=43 // pred_check
          %p1717 = pneg %p263
        $region78: #{tpu_custom_call.1} parent=43 // pred_check_branch
          %1719 = sbr.rel (%p1717) target = $region80
        $region79: #{tpu_custom_call.1} parent=43 // pred_region
          %s1720 = smul.u32 4, %s37
          %s1722 = ssub.s32 512, 512
          %1723 = vsyncadd %s1677, %s1722
          %s1724 = smul.addr %s36, 8
          %s1725 = sadd.s32 %s1720, %s1724
          %s1726 = smul.addr %s1725, 64
          %s1727 = scalar_lea.hbm %s8, %s1726
          %s1728 = sshll.u32 %s1680, 4
          %s1729 = int_to_ptr.vmem [resolvable:$true] %s1728
          %1734 = dma.vmem_to_hbm [thread:$0]  %s1729, 512, %s1727, %s1677, 64, 64, 4
        $region80: #{tpu_custom_call.1} parent=43 // pred_fallthru
          _
      $region44: #{tpu_custom_call.1} parent=5 // pred_fallthru
        _
      %p1735 = scmp.le.s32.totalorder 2, %s27
      // Predicated region
      $region81: #{tpu_custom_call.1} parent=5 // pred_check
        %p1736 = pneg %p1735
      $region82: #{tpu_custom_call.1} parent=5 // pred_check_branch
        %1738 = sbr.rel (%p1736) target = $region84
      $region83: #{tpu_custom_call.1} parent=5 // pred_region
        %s1739 = ssub.s32 %s27, 2
        // Predicated region
        $region85: #{tpu_custom_call.1} parent=83 // pred_check
          %p1740 = pneg %p213
        $region86: #{tpu_custom_call.1} parent=83 // pred_check_branch
          %1742 = sbr.rel (%p1740) target = $region88
        $region87: #{tpu_custom_call.1} parent=83 // pred_region
          %s1743 = sand.u32 %s198, 1
          %s1744 = scalar_lea.sflag [#allocation4], %s1743
          %s1745 = sand.u32 %s198, 1
          %s1746 = smul.addr %s1745, 32
          %s1747 = scalar_lea.vmem [#allocation13], %s1746
          %1748 = dma.done %s1744, 512
        $region88: #{tpu_custom_call.1} parent=83 // pred_fallthru
          _
        // Predicated region
        $region89: #{tpu_custom_call.1} parent=83 // pred_check
          %p1749 = pneg %p241
        $region90: #{tpu_custom_call.1} parent=83 // pred_check_branch
          %1751 = sbr.rel (%p1749) target = $region92
        $region91: #{tpu_custom_call.1} parent=83 // pred_region
          %s1752 = sand.u32 %s33, 1
          %s1753 = scalar_lea.sflag [#allocation15], %s1752
          %s1754 = sand.u32 %s226, 1
          %s1755 = smul.addr %s1754, 32
          %s1756 = scalar_lea.vmem [#allocation14], %s1755
          %1757 = dma.done %s1753, 512
        $region92: #{tpu_custom_call.1} parent=83 // pred_fallthru
          _
        // Predicated region
        $region93: #{tpu_custom_call.1} parent=83 // pred_check
          %p1758 = pneg %p269
        $region94: #{tpu_custom_call.1} parent=83 // pred_check_branch
          %1760 = sbr.rel (%p1758) target = $region96
        $region95: #{tpu_custom_call.1} parent=83 // pred_region
          %s1761 = sand.u32 %s33, 1
          %s1762 = scalar_lea.sflag [#allocation15], %s1761
          %s1763 = sand.u32 %s254, 1
          %s1764 = smul.addr %s1763, 32
          %s1765 = scalar_lea.vmem [#allocation16], %s1764
          %1766 = dma.done %s1762, 512
        $region96: #{tpu_custom_call.1} parent=83 // pred_fallthru
          _
      $region84: #{tpu_custom_call.1} parent=5 // pred_fallthru
        _
    $region6: #{tpu_custom_call.1} parent=1 // loop_footer
      %s31 = sadd.s32 1, %s27
    $region7: #{tpu_custom_call.1} parent=1 // loop_footer_branch
      %26 = sbr.rel target = $region3
    $region8: #{tpu_custom_call.1} parent=1 // loop_exit
      _
    %1767 = vsyncpa [#allocation3], 1
    %s1768 = scalar_lea.sflag [#allocation3], 1
    %1769 = vsyncpa %s1768, 1
    %1770 = vsyncpa [#allocation6], 1
    %1771 = vsyncpa [#allocation9], 1
    %1772 = vsyncpa [#allocation12], 1
    %1773 = vsyncpa [#allocation4], 1
    %s1774 = scalar_lea.sflag [#allocation4], 1
    %1775 = vsyncpa %s1774, 1
    %1776 = vsyncpa [#allocation15], 1
    %s1777 = scalar_lea.sflag [#allocation15], 1
    %1778 = vsyncpa %s1777, 1

</llo_original>
